<compile_context>
chip_gen: v7x
topology: tpu7x:2x2x1
jax: 0.10.0
libtpu: 0.0.40
codegen_flags: <defaults>
</compile_context>

<pallas_src>
import functools

import jax
import jax.numpy as jnp
import numpy as np
from jax import lax
from jax.experimental import pallas as pl
from jax.experimental.pallas import tpu as pltpu


def _unpack_conv2d_kernel(x_ref, w_ref, scale_ref, shift_ref, out_ref, *,
                          TH, TW, K, CIN, COUT, compute_dtype):
    """One (batch, row-tile) step: KxK conv taps as MXU matmuls + folded BN + ReLU.

    x_ref:    (1, TH+K-1, TW+K-1, CIN)  haloed, spatially pre-padded input tile (NHWC)
    w_ref:    (K, K, CIN, COUT)         conv weights, HWIO
    scale/shift: (1, COUT)              folded BatchNorm (eval mode)
    out_ref:  (1, TH, TW, COUT)         conv+BN+ReLU output tile (NHWC, lane-dense COUT)
    """
    xt = x_ref[0]                                  # (TH+K-1, TW+K-1, CIN)

    acc = jnp.zeros((TH * TW, COUT), jnp.float32)
    for kh in range(K):
        for kw in range(K):
            tap = xt[kh:kh + TH, kw:kw + TW, :].reshape(TH * TW, CIN)
            acc = acc + jnp.dot(tap.astype(compute_dtype), w_ref[kh, kw],
                                preferred_element_type=jnp.float32)

    z = acc * scale_ref[...] + shift_ref[...]      # folded BatchNorm2d (eval mode)
    z = jnp.maximum(z, 0.0)                        # ReLU
    out_ref[...] = z.reshape(1, TH, TW, COUT).astype(out_ref.dtype)


def unpack_layer_conv2d(x, params, *, r=2, kernel_size=3, eps=1e-5,
                        tile_rows=None, matmul_dtype=jnp.float32,
                        vmem_limit_bytes=None):
    """x: NCHW [B, Cin, H, W] -> NCHW [B, Co, r*H, r*W]  (UnpackLayerConv2d forward)."""
    w = params["w"]                                 # (Co*r^2, Cin, K, K)
    gamma, beta = params["gamma"], params["beta"]
    rmean, rvar = params["rmean"], params["rvar"]

    B, Cin, H, W = x.shape
    CoutR2 = w.shape[0]
    assert CoutR2 % (r * r) == 0
    Co = CoutR2 // (r * r)
    K = kernel_size
    P = K // 2

    # ---- row-tile size (sized per generation at real resolutions; must divide H) ----
    if tile_rows is None or H % tile_rows != 0:
        tile_rows = H
    TH = tile_rows
    T = H // TH
    # TODO(synk): for very wide images also tile W (second halo axis) to bound VMEM further.

    # ---------- wrapper glue: layout / halo / parameter preprocessing (plain JAX) -------
    x_nhwc = jnp.transpose(x, (0, 2, 3, 1)).astype(jnp.float32)          # (B,H,W,Cin)
    x_pad = jnp.pad(x_nhwc, ((0, 0), (P, P), (P, P), (0, 0)))            # (B,H+2P,W+2P,Cin)

    # Materialize the 1-tile halo once so BlockSpec tiles are non-overlapping.
    row_idx = jnp.arange(T)[:, None] * TH + jnp.arange(TH + 2 * P)[None, :]
    x_tiles = x_pad[:, row_idx]                                          # (B,T,TH+2P,W+2P,Cin)
    x_tiles = x_tiles.reshape(B * T, TH + 2 * P, W + 2 * P, Cin)

    # Conv weight (Co*r^2, Cin, K, K) -> HWIO (K, K, Cin, Co*r^2)
    w_k = jnp.transpose(w, (2, 3, 1, 0)).astype(matmul_dtype)

    # TODO(synk): PyTorch BatchNorm2d in train() mode uses batch statistics; here we fold
    #             eval-mode running stats into a per-channel scale/shift.
    inv = gamma / jnp.sqrt(rvar + eps)
    scale = inv[None, :].astype(jnp.float32)                             # (1, Co*r^2)
    shift = (beta - rmean * inv)[None, :].astype(jnp.float32)            # (1, Co*r^2)

    kernel = functools.partial(_unpack_conv2d_kernel, TH=TH, TW=W, K=K,
                               CIN=Cin, COUT=CoutR2, compute_dtype=matmul_dtype)

    y = pl.pallas_call(
        kernel,
        out_shape=jax.ShapeDtypeStruct((B * T, TH, W, CoutR2), jnp.float32),
        grid=(B, T),
        in_specs=[
            pl.BlockSpec((1, TH + 2 * P, W + 2 * P, Cin),
                         lambda b, t: (b * T + t, 0, 0, 0)),
            pl.BlockSpec((K, K, Cin, CoutR2), lambda b, t: (0, 0, 0, 0)),
            pl.BlockSpec((1, CoutR2), lambda b, t: (0, 0)),
            pl.BlockSpec((1, CoutR2), lambda b, t: (0, 0)),
        ],
        out_specs=pl.BlockSpec((1, TH, W, CoutR2),
                               lambda b, t: (b * T + t, 0, 0, 0)),
        compiler_params=pltpu.CompilerParams(
            dimension_semantics=("parallel", "parallel"),
            vmem_limit_bytes=vmem_limit_bytes),   # raise (e.g. 64-96 MiB) on v6e for big tiles
    )(x_tiles, w_k, scale, shift)

    # (B*T, TH, W, C) -> (B, H, W, C): row tiles are contiguous in H.
    y = y.reshape(B, H, W, CoutR2)

    # PixelShuffle(r): out[b, c, h*r+i, w*r+j] = y[b, h, w, c*r^2 + i*r + j]  (layout only)
    y = y.reshape(B, H, W, Co, r, r)
    y = jnp.transpose(y, (0, 3, 1, 4, 2, 5))                             # (B,Co,H,r,W,r)
    return y.reshape(B, Co, H * r, W * r)                                # NCHW


def reference(x, params, *, r=2, kernel_size=3, eps=1e-5):
    """Pure-JAX reference mirroring the PyTorch forward (eval-mode BN)."""
    w = params["w"]
    gamma, beta = params["gamma"], params["beta"]
    rmean, rvar = params["rmean"], params["rvar"]
    K = kernel_size
    P = K // 2

    y = lax.conv_general_dilated(
        x.astype(jnp.float32), w.astype(jnp.float32), (1, 1),
        [(P, P), (P, P)], dimension_numbers=("NCHW", "OIHW", "NCHW"))
    inv = gamma / jnp.sqrt(rvar + eps)
    y = (y - rmean[None, :, None, None]) * inv[None, :, None, None] + beta[None, :, None, None]
    y = jnp.maximum(y, 0.0)

    B, CR2, H, W = y.shape
    Co = CR2 // (r * r)
    y = y.reshape(B, Co, r, r, H, W)
    y = jnp.transpose(y, (0, 1, 4, 2, 5, 3))                             # (B,Co,H,r,W,r)
    return y.reshape(B, Co, H * r, W * r)


if __name__ == "__main__":
    B, Cin, H, W = 2, 4, 16, 16
    Co, K, r = 4, 3, 2
    CoutR2 = Co * r * r

    key = jax.random.PRNGKey(0)
    ks = jax.random.split(key, 6)
    x = jax.random.normal(ks[0], (B, Cin, H, W), jnp.float32)
    params = dict(
        w=0.1 * jax.random.normal(ks[1], (CoutR2, Cin, K, K), jnp.float32),
        gamma=jax.random.uniform(ks[2], (CoutR2,), jnp.float32, 0.5, 1.5),
        beta=0.1 * jax.random.normal(ks[3], (CoutR2,), jnp.float32),
        rmean=0.1 * jax.random.normal(ks[4], (CoutR2,), jnp.float32),
        rvar=jax.random.uniform(ks[5], (CoutR2,), jnp.float32, 0.5, 1.5),
    )

    out = unpack_layer_conv2d(x, params, r=r, kernel_size=K, tile_rows=8)
    out = jax.block_until_ready(out)

    ref = reference(x, params, r=r, kernel_size=K)
    np.testing.assert_allclose(np.asarray(out), np.asarray(ref), rtol=1e-3, atol=1e-3)
    print("KERNEL_OK")
</pallas_src>

<mosaic_0001>
module attributes {stable_mosaic.version = 11 : i64} {
  func.func @_unpack_conv2d_kernel(%arg0: i32, %arg1: i32, %arg2: memref<1x10x18x4xf32, #tpu.memory_space<vmem>>, %arg3: memref<3x3x4x16xf32, #tpu.memory_space<vmem>>, %arg4: memref<1x16xf32, #tpu.memory_space<vmem>>, %arg5: memref<1x16xf32, #tpu.memory_space<vmem>>, %arg6: memref<1x8x16x16xf32, #tpu.memory_space<vmem>>) attributes {dimension_semantics = [#tpu.dimension_semantics<parallel>, #tpu.dimension_semantics<parallel>], iteration_bounds = array<i64: 2, 2>, scalar_prefetch = 0 : i64, scratch_operands = 0 : i64, tpu.core_type = #tpu.core_type<tc>, window_params = [{transform_indices = @transform_0, window_bounds = array<i64: 1, 10, 18, 4>}, {pipeline_mode = #tpu.pipeline_mode<synchronous>, transform_indices = @transform_1, window_bounds = array<i64: 3, 3, 4, 16>}, {pipeline_mode = #tpu.pipeline_mode<synchronous>, transform_indices = @transform_2, window_bounds = array<i64: 1, 16>}, {pipeline_mode = #tpu.pipeline_mode<synchronous>, transform_indices = @transform_3, window_bounds = array<i64: 1, 16>}, {transform_indices = @transform_4, window_bounds = array<i64: 1, 8, 16, 16>}]} {
    %c0 = arith.constant 0 : index
    %c0_0 = arith.constant 0 : index
    %c0_1 = arith.constant 0 : index
    %c0_2 = arith.constant 0 : index
    %0 = vector.load %arg2[%c0, %c0_0, %c0_1, %c0_2] : memref<1x10x18x4xf32, #tpu.memory_space<vmem>>, vector<1x10x18x4xf32>
    %1 = vector.shape_cast %0 : vector<1x10x18x4xf32> to vector<10x18x4xf32>
    %cst = arith.constant 0.000000e+00 : f32
    %2 = vector.broadcast %cst : f32 to vector<128x16xf32>
    %3 = vector.extract_strided_slice %1 {offsets = [0, 0, 0], sizes = [8, 16, 4], strides = [1, 1, 1]} : vector<10x18x4xf32> to vector<8x16x4xf32>
    %4 = vector.shape_cast %3 : vector<8x16x4xf32> to vector<128x4xf32>
    %c0_3 = arith.constant 0 : index
    %c0_4 = arith.constant 0 : index
    %c0_5 = arith.constant 0 : index
    %c0_6 = arith.constant 0 : index
    %5 = vector.load %arg3[%c0_3, %c0_4, %c0_5, %c0_6] : memref<3x3x4x16xf32, #tpu.memory_space<vmem>>, vector<1x1x4x16xf32>
    %6 = vector.shape_cast %5 : vector<1x1x4x16xf32> to vector<4x16xf32>
    %cst_7 = arith.constant dense<0.000000e+00> : vector<128x16xf32>
    %7 = tpu.matmul %4, %6, %cst_7 {dimension_numbers = #tpu.dot_dimension_numbers<[1], [0], [0], [1], [0, 0, 1, 1], [], []>} : vector<128x4xf32>, vector<4x16xf32>, vector<128x16xf32> -> vector<128x16xf32>
    %8 = arith.addf %2, %7 : vector<128x16xf32>
    %9 = vector.extract_strided_slice %1 {offsets = [0, 1, 0], sizes = [8, 16, 4], strides = [1, 1, 1]} : vector<10x18x4xf32> to vector<8x16x4xf32>
    %10 = vector.shape_cast %9 : vector<8x16x4xf32> to vector<128x4xf32>
    %c0_8 = arith.constant 0 : index
    %c1 = arith.constant 1 : index
    %c0_9 = arith.constant 0 : index
    %c0_10 = arith.constant 0 : index
    %11 = vector.load %arg3[%c0_8, %c1, %c0_9, %c0_10] : memref<3x3x4x16xf32, #tpu.memory_space<vmem>>, vector<1x1x4x16xf32>
    %12 = vector.shape_cast %11 : vector<1x1x4x16xf32> to vector<4x16xf32>
    %cst_11 = arith.constant dense<0.000000e+00> : vector<128x16xf32>
    %13 = tpu.matmul %10, %12, %cst_11 {dimension_numbers = #tpu.dot_dimension_numbers<[1], [0], [0], [1], [0, 0, 1, 1], [], []>} : vector<128x4xf32>, vector<4x16xf32>, vector<128x16xf32> -> vector<128x16xf32>
    %14 = arith.addf %8, %13 : vector<128x16xf32>
    %15 = vector.extract_strided_slice %1 {offsets = [0, 2, 0], sizes = [8, 16, 4], strides = [1, 1, 1]} : vector<10x18x4xf32> to vector<8x16x4xf32>
    %16 = vector.shape_cast %15 : vector<8x16x4xf32> to vector<128x4xf32>
    %c0_12 = arith.constant 0 : index
    %c2 = arith.constant 2 : index
    %c0_13 = arith.constant 0 : index
    %c0_14 = arith.constant 0 : index
    %17 = vector.load %arg3[%c0_12, %c2, %c0_13, %c0_14] : memref<3x3x4x16xf32, #tpu.memory_space<vmem>>, vector<1x1x4x16xf32>
    %18 = vector.shape_cast %17 : vector<1x1x4x16xf32> to vector<4x16xf32>
    %cst_15 = arith.constant dense<0.000000e+00> : vector<128x16xf32>
    %19 = tpu.matmul %16, %18, %cst_15 {dimension_numbers = #tpu.dot_dimension_numbers<[1], [0], [0], [1], [0, 0, 1, 1], [], []>} : vector<128x4xf32>, vector<4x16xf32>, vector<128x16xf32> -> vector<128x16xf32>
    %20 = arith.addf %14, %19 : vector<128x16xf32>
    %21 = vector.extract_strided_slice %1 {offsets = [1, 0, 0], sizes = [8, 16, 4], strides = [1, 1, 1]} : vector<10x18x4xf32> to vector<8x16x4xf32>
    %22 = vector.shape_cast %21 : vector<8x16x4xf32> to vector<128x4xf32>
    %c1_16 = arith.constant 1 : index
    %c0_17 = arith.constant 0 : index
    %c0_18 = arith.constant 0 : index
    %c0_19 = arith.constant 0 : index
    %23 = vector.load %arg3[%c1_16, %c0_17, %c0_18, %c0_19] : memref<3x3x4x16xf32, #tpu.memory_space<vmem>>, vector<1x1x4x16xf32>
    %24 = vector.shape_cast %23 : vector<1x1x4x16xf32> to vector<4x16xf32>
    %cst_20 = arith.constant dense<0.000000e+00> : vector<128x16xf32>
    %25 = tpu.matmul %22, %24, %cst_20 {dimension_numbers = #tpu.dot_dimension_numbers<[1], [0], [0], [1], [0, 0, 1, 1], [], []>} : vector<128x4xf32>, vector<4x16xf32>, vector<128x16xf32> -> vector<128x16xf32>
    %26 = arith.addf %20, %25 : vector<128x16xf32>
    %27 = vector.extract_strided_slice %1 {offsets = [1, 1, 0], sizes = [8, 16, 4], strides = [1, 1, 1]} : vector<10x18x4xf32> to vector<8x16x4xf32>
    %28 = vector.shape_cast %27 : vector<8x16x4xf32> to vector<128x4xf32>
    %c1_21 = arith.constant 1 : index
    %c1_22 = arith.constant 1 : index
    %c0_23 = arith.constant 0 : index
    %c0_24 = arith.constant 0 : index
    %29 = vector.load %arg3[%c1_21, %c1_22, %c0_23, %c0_24] : memref<3x3x4x16xf32, #tpu.memory_space<vmem>>, vector<1x1x4x16xf32>
    %30 = vector.shape_cast %29 : vector<1x1x4x16xf32> to vector<4x16xf32>
    %cst_25 = arith.constant dense<0.000000e+00> : vector<128x16xf32>
    %31 = tpu.matmul %28, %30, %cst_25 {dimension_numbers = #tpu.dot_dimension_numbers<[1], [0], [0], [1], [0, 0, 1, 1], [], []>} : vector<128x4xf32>, vector<4x16xf32>, vector<128x16xf32> -> vector<128x16xf32>
    %32 = arith.addf %26, %31 : vector<128x16xf32>
    %33 = vector.extract_strided_slice %1 {offsets = [1, 2, 0], sizes = [8, 16, 4], strides = [1, 1, 1]} : vector<10x18x4xf32> to vector<8x16x4xf32>
    %34 = vector.shape_cast %33 : vector<8x16x4xf32> to vector<128x4xf32>
    %c1_26 = arith.constant 1 : index
    %c2_27 = arith.constant 2 : index
    %c0_28 = arith.constant 0 : index
    %c0_29 = arith.constant 0 : index
    %35 = vector.load %arg3[%c1_26, %c2_27, %c0_28, %c0_29] : memref<3x3x4x16xf32, #tpu.memory_space<vmem>>, vector<1x1x4x16xf32>
    %36 = vector.shape_cast %35 : vector<1x1x4x16xf32> to vector<4x16xf32>
    %cst_30 = arith.constant dense<0.000000e+00> : vector<128x16xf32>
    %37 = tpu.matmul %34, %36, %cst_30 {dimension_numbers = #tpu.dot_dimension_numbers<[1], [0], [0], [1], [0, 0, 1, 1], [], []>} : vector<128x4xf32>, vector<4x16xf32>, vector<128x16xf32> -> vector<128x16xf32>
    %38 = arith.addf %32, %37 : vector<128x16xf32>
    %39 = vector.extract_strided_slice %1 {offsets = [2, 0, 0], sizes = [8, 16, 4], strides = [1, 1, 1]} : vector<10x18x4xf32> to vector<8x16x4xf32>
    %40 = vector.shape_cast %39 : vector<8x16x4xf32> to vector<128x4xf32>
    %c2_31 = arith.constant 2 : index
    %c0_32 = arith.constant 0 : index
    %c0_33 = arith.constant 0 : index
    %c0_34 = arith.constant 0 : index
    %41 = vector.load %arg3[%c2_31, %c0_32, %c0_33, %c0_34] : memref<3x3x4x16xf32, #tpu.memory_space<vmem>>, vector<1x1x4x16xf32>
    %42 = vector.shape_cast %41 : vector<1x1x4x16xf32> to vector<4x16xf32>
    %cst_35 = arith.constant dense<0.000000e+00> : vector<128x16xf32>
    %43 = tpu.matmul %40, %42, %cst_35 {dimension_numbers = #tpu.dot_dimension_numbers<[1], [0], [0], [1], [0, 0, 1, 1], [], []>} : vector<128x4xf32>, vector<4x16xf32>, vector<128x16xf32> -> vector<128x16xf32>
    %44 = arith.addf %38, %43 : vector<128x16xf32>
    %45 = vector.extract_strided_slice %1 {offsets = [2, 1, 0], sizes = [8, 16, 4], strides = [1, 1, 1]} : vector<10x18x4xf32> to vector<8x16x4xf32>
    %46 = vector.shape_cast %45 : vector<8x16x4xf32> to vector<128x4xf32>
    %c2_36 = arith.constant 2 : index
    %c1_37 = arith.constant 1 : index
    %c0_38 = arith.constant 0 : index
    %c0_39 = arith.constant 0 : index
    %47 = vector.load %arg3[%c2_36, %c1_37, %c0_38, %c0_39] : memref<3x3x4x16xf32, #tpu.memory_space<vmem>>, vector<1x1x4x16xf32>
    %48 = vector.shape_cast %47 : vector<1x1x4x16xf32> to vector<4x16xf32>
    %cst_40 = arith.constant dense<0.000000e+00> : vector<128x16xf32>
    %49 = tpu.matmul %46, %48, %cst_40 {dimension_numbers = #tpu.dot_dimension_numbers<[1], [0], [0], [1], [0, 0, 1, 1], [], []>} : vector<128x4xf32>, vector<4x16xf32>, vector<128x16xf32> -> vector<128x16xf32>
    %50 = arith.addf %44, %49 : vector<128x16xf32>
    %51 = vector.extract_strided_slice %1 {offsets = [2, 2, 0], sizes = [8, 16, 4], strides = [1, 1, 1]} : vector<10x18x4xf32> to vector<8x16x4xf32>
    %52 = vector.shape_cast %51 : vector<8x16x4xf32> to vector<128x4xf32>
    %c2_41 = arith.constant 2 : index
    %c2_42 = arith.constant 2 : index
    %c0_43 = arith.constant 0 : index
    %c0_44 = arith.constant 0 : index
    %53 = vector.load %arg3[%c2_41, %c2_42, %c0_43, %c0_44] : memref<3x3x4x16xf32, #tpu.memory_space<vmem>>, vector<1x1x4x16xf32>
    %54 = vector.shape_cast %53 : vector<1x1x4x16xf32> to vector<4x16xf32>
    %cst_45 = arith.constant dense<0.000000e+00> : vector<128x16xf32>
    %55 = tpu.matmul %52, %54, %cst_45 {dimension_numbers = #tpu.dot_dimension_numbers<[1], [0], [0], [1], [0, 0, 1, 1], [], []>} : vector<128x4xf32>, vector<4x16xf32>, vector<128x16xf32> -> vector<128x16xf32>
    %56 = arith.addf %50, %55 : vector<128x16xf32>
    %c0_46 = arith.constant 0 : index
    %c0_47 = arith.constant 0 : index
    %57 = vector.load %arg4[%c0_46, %c0_47] : memref<1x16xf32, #tpu.memory_space<vmem>>, vector<1x16xf32>
    %58 = vector.broadcast %57 : vector<1x16xf32> to vector<128x16xf32>
    %59 = arith.mulf %56, %58 : vector<128x16xf32>
    %c0_48 = arith.constant 0 : index
    %c0_49 = arith.constant 0 : index
    %60 = vector.load %arg5[%c0_48, %c0_49] : memref<1x16xf32, #tpu.memory_space<vmem>>, vector<1x16xf32>
    %61 = vector.broadcast %60 : vector<1x16xf32> to vector<128x16xf32>
    %62 = arith.addf %59, %61 : vector<128x16xf32>
    %cst_50 = arith.constant 0.000000e+00 : f32
    %63 = vector.broadcast %cst_50 : f32 to vector<128x16xf32>
    %64 = arith.maximumf %62, %63 : vector<128x16xf32>
    %65 = vector.shape_cast %64 : vector<128x16xf32> to vector<1x8x16x16xf32>
    %c0_51 = arith.constant 0 : index
    %c0_52 = arith.constant 0 : index
    %c0_53 = arith.constant 0 : index
    %c0_54 = arith.constant 0 : index
    %66 = vector.load %arg6[%c0_51, %c0_52, %c0_53, %c0_54] : memref<1x8x16x16xf32, #tpu.memory_space<vmem>>, vector<1x8x16x16xf32>
    tpu.vector_store %arg6[%c0_51, %c0_52, %c0_53, %c0_54], %65 {strides = array<i32>} : memref<1x8x16x16xf32, #tpu.memory_space<vmem>>, vector<1x8x16x16xf32>,
    return
  }
  func.func @transform_0(%arg0: i32, %arg1: i32) -> (i32, i32, i32, i32) {
    %c2_i32 = arith.constant 2 : i32
    %0 = arith.muli %arg0, %c2_i32 : i32
    %1 = arith.addi %0, %arg1 : i32
    %c0_i32 = arith.constant 0 : i32
    %c0_i32_0 = arith.constant 0 : i32
    %c0_i32_1 = arith.constant 0 : i32
    %c0_i32_2 = arith.constant 0 : i32
    return %1, %c0_i32, %c0_i32_0, %c0_i32_1 : i32, i32, i32, i32
  }
  func.func @transform_1(%arg0: i32, %arg1: i32) -> (i32, i32, i32, i32) {
    %c0_i32 = arith.constant 0 : i32
    %c0_i32_0 = arith.constant 0 : i32
    %c0_i32_1 = arith.constant 0 : i32
    %c0_i32_2 = arith.constant 0 : i32
    %c0_i32_3 = arith.constant 0 : i32
    return %c0_i32, %c0_i32_0, %c0_i32_1, %c0_i32_2 : i32, i32, i32, i32
  }
  func.func @transform_2(%arg0: i32, %arg1: i32) -> (i32, i32) {
    %c0_i32 = arith.constant 0 : i32
    %c0_i32_0 = arith.constant 0 : i32
    %c0_i32_1 = arith.constant 0 : i32
    return %c0_i32, %c0_i32_0 : i32, i32
  }
  func.func @transform_3(%arg0: i32, %arg1: i32) -> (i32, i32) {
    %c0_i32 = arith.constant 0 : i32
    %c0_i32_0 = arith.constant 0 : i32
    %c0_i32_1 = arith.constant 0 : i32
    return %c0_i32, %c0_i32_0 : i32, i32
  }
  func.func @transform_4(%arg0: i32, %arg1: i32) -> (i32, i32, i32, i32) {
    %c2_i32 = arith.constant 2 : i32
    %0 = arith.muli %arg0, %c2_i32 : i32
    %1 = arith.addi %0, %arg1 : i32
    %c0_i32 = arith.constant 0 : i32
    %c0_i32_0 = arith.constant 0 : i32
    %c0_i32_1 = arith.constant 0 : i32
    %c0_i32_2 = arith.constant 0 : i32
    return %1, %c0_i32, %c0_i32_0, %c0_i32_1 : i32, i32, i32, i32
  }
}

</mosaic_0001>

<llo_original>
// kernel: tpu_custom_call.1
$region0: #{tpu_custom_call.1}
  #allocation0 [shape = 'u32[]', space=smem, size = 0x4, offset = 0x4, fixed_abs, tag = 'smem constant byte address 0x4 - core index']
  #allocation1 [shape = 'u32[144,128]{1,0:T(1,128)}', space=vmem, size = 0x12000, scoped, tag = 'internal scratch']
  %s0 = inlined_call_operand.vmem [shape: f32[4,10,18,4], index: 0, kind: input, shape index: {}]
  %s1 = inlined_call_operand.vmem [shape: f32[3,3,4,16], index: 1, kind: input, shape index: {}]
  %s2 = inlined_call_operand.vmem [shape: f32[1,16], index: 2, kind: input, shape index: {}]
  %s3 = inlined_call_operand.vmem [shape: f32[1,16], index: 3, kind: input, shape index: {}]
  %s4 = inlined_call_operand.hbm [shape: f32[4,8,16,16], index: 4, kind: output, shape index: {}]
  %s5 = sld [smem:[#allocation0]]
  $region49: #{tpu_custom_call.1} parent=0
    _
  %s7 = ssub.s32 1, %s5
  %s8 = scalar_select 0, %s7, %s5
  $region1: #{tpu_custom_call.1} parent=0
    #allocation2 [shape = 'u8[131072]{0}', space=vmem, size = 0x20000, scoped, tag = 'output window, operand 0']
    #allocation3 [shape = 's32[2]{0}', space=sflag, size = 0x8, scoped, tag = 'scoped memory for tpu_custom_call.1']
    %9 = vsyncpa [#allocation3], 0
    %s10 = scalar_lea.sflag [#allocation3], 1
    %11 = vsyncpa %s10, 0
    loop: start=0, step=1, limit=6
    $region2: #{tpu_custom_call.1} parent=1 // loop_pre_header
      _
    $region3: #{tpu_custom_call.1} parent=1 // loop_header
      %s13 = sphi 0, %s17
      %p14 = scmp.ge.s32.totalorder %s13, 6
      %s20 = sphi 0, %s32
      %s21 = sphi 0, %s28
      %s22 = sphi 0, %s20
      %s23 = sphi 0, %s21
      %s24 = sphi 0, %s22
      %s25 = sphi 0, %s23
      %s39 = sphi 0, %s41
      %s42 = sphi 0, %s39
      %s43 = sphi 0, %s42
      %s59 = sphi 0, %s43
      %s63 = sphi 0, %s63
      %s65 = sphi 0, %s63
      %s66 = sphi 0, %s65
      %s80 = sphi 0, %s66
      %s84 = sphi 0, %s84
      %s86 = sphi 0, %s84
      %s87 = sphi 0, %s86
      %s101 = sphi 0, %s87
      %s105 = sphi 0, %s105
      %s107 = sphi 0, %s105
      %s108 = sphi 0, %s107
      %s122 = sphi 0, %s108
      %s132 = sphi 0, %s134
      %s135 = sphi 0, %s132
      %s136 = sphi 0, %s135
      %s152 = sphi 0, %s136
    $region4: #{tpu_custom_call.1} parent=1 // loop_header_branch
      %16 = sbr.rel (%p14) target = $region8
    $region5: #{tpu_custom_call.1} parent=1 // loop_body
      %s18 = ssub.s32 %s13, 1
      %s19 = ssub.s32 %s13, 2
      %s26 = sadd.s32 1, %s21
      %p27 = scmp.ge.s32.totalorder %s26, 2
      %s28 = scalar_select %p27, 0, %s26
      %s29 = sadd.s32 1, %s20
      %s30 = scalar_select %p27, %s29, %s20
      %p31 = scmp.ge.s32.totalorder %s30, 2
      %s32 = scalar_select %p31, 0, %s30
      %s33 = smul.u32 %s20, 2
      %s34 = sadd.s32 %s33, %s21
      %s35 = smul.u32 %s32, 2
      %s36 = sadd.s32 %s35, %s28
      %s37 = ssub.s32 %s34, %s36
      %p38 = scmp.eq.s32.totalorder %s37, 0
      %s40 = sadd.s32 %s39, 1
      %s41 = scalar_select %p38, %s39, %s40
      %p44 = pneg %p38
      %p45 = scmp.eq.s32.totalorder %s13, 3
      %p46 = por %p44, %p45
      %p47 = scmp.ne.s32.totalorder %s39, %s42
      %p48 = scmp.eq.s32.totalorder %s13, 0
      %p49 = por %p47, %p48
      %p50 = scmp.ne.s32.totalorder %s39, %s42
      %p51 = scmp.eq.s32.totalorder %s18, 3
      %p52 = por %p50, %p51
      %p53 = scmp.ne.s32.totalorder %s42, %s43
      %p54 = scmp.eq.s32.totalorder %s18, 0
      %p55 = por %p53, %p54
      %p56 = scmp.ne.s32.totalorder %s42, %s43
      %p57 = scmp.eq.s32.totalorder %s19, 3
      %p58 = por %p56, %p57
      %p60 = scmp.ne.s32.totalorder %s43, %s59
      %p61 = scmp.eq.s32.totalorder %s19, 0
      %p62 = por %p60, %p61
      %s64 = sadd.s32 %s63, 1
      %p67 = scmp.eq.s32.totalorder %s13, 3
      %p68 = scmp.ne.s32.totalorder %s63, %s65
      %p69 = scmp.eq.s32.totalorder %s13, 0
      %p70 = por %p68, %p69
      %p71 = scmp.ne.s32.totalorder %s63, %s65
      %p72 = scmp.eq.s32.totalorder %s18, 3
      %p73 = por %p71, %p72
      %p74 = scmp.ne.s32.totalorder %s65, %s66
      %p75 = scmp.eq.s32.totalorder %s18, 0
      %p76 = por %p74, %p75
      %p77 = scmp.ne.s32.totalorder %s65, %s66
      %p78 = scmp.eq.s32.totalorder %s19, 3
      %p79 = por %p77, %p78
      %p81 = scmp.ne.s32.totalorder %s66, %s80
      %p82 = scmp.eq.s32.totalorder %s19, 0
      %p83 = por %p81, %p82
      %s85 = sadd.s32 %s84, 1
      %p88 = scmp.eq.s32.totalorder %s13, 3
      %p89 = scmp.ne.s32.totalorder %s84, %s86
      %p90 = scmp.eq.s32.totalorder %s13, 0
      %p91 = por %p89, %p90
      %p92 = scmp.ne.s32.totalorder %s84, %s86
      %p93 = scmp.eq.s32.totalorder %s18, 3
      %p94 = por %p92, %p93
      %p95 = scmp.ne.s32.totalorder %s86, %s87
      %p96 = scmp.eq.s32.totalorder %s18, 0
      %p97 = por %p95, %p96
      %p98 = scmp.ne.s32.totalorder %s86, %s87
      %p99 = scmp.eq.s32.totalorder %s19, 3
      %p100 = por %p98, %p99
      %p102 = scmp.ne.s32.totalorder %s87, %s101
      %p103 = scmp.eq.s32.totalorder %s19, 0
      %p104 = por %p102, %p103
      %s106 = sadd.s32 %s105, 1
      %p109 = scmp.eq.s32.totalorder %s13, 3
      %p110 = scmp.ne.s32.totalorder %s105, %s107
      %p111 = scmp.eq.s32.totalorder %s13, 0
      %p112 = por %p110, %p111
      %p113 = scmp.ne.s32.totalorder %s105, %s107
      %p114 = scmp.eq.s32.totalorder %s18, 3
      %p115 = por %p113, %p114
      %p116 = scmp.ne.s32.totalorder %s107, %s108
      %p117 = scmp.eq.s32.totalorder %s18, 0
      %p118 = por %p116, %p117
      %p119 = scmp.ne.s32.totalorder %s107, %s108
      %p120 = scmp.eq.s32.totalorder %s19, 3
      %p121 = por %p119, %p120
      %p123 = scmp.ne.s32.totalorder %s108, %s122
      %p124 = scmp.eq.s32.totalorder %s19, 0
      %p125 = por %p123, %p124
      %s126 = smul.u32 %s20, 2
      %s127 = sadd.s32 %s126, %s21
      %s128 = smul.u32 %s32, 2
      %s129 = sadd.s32 %s128, %s28
      %s130 = ssub.s32 %s127, %s129
      %p131 = scmp.eq.s32.totalorder %s130, 0
      %s133 = sadd.s32 %s132, 1
      %s134 = scalar_select %p131, %s132, %s133
      %p137 = pneg %p131
      %p138 = scmp.eq.s32.totalorder %s13, 3
      %p139 = por %p137, %p138
      %p140 = scmp.ne.s32.totalorder %s132, %s135
      %p141 = scmp.eq.s32.totalorder %s13, 0
      %p142 = por %p140, %p141
      %p143 = scmp.ne.s32.totalorder %s132, %s135
      %p144 = scmp.eq.s32.totalorder %s18, 3
      %p145 = por %p143, %p144
      %p146 = scmp.ne.s32.totalorder %s135, %s136
      %p147 = scmp.eq.s32.totalorder %s18, 0
      %p148 = por %p146, %p147
      %p149 = scmp.ne.s32.totalorder %s135, %s136
      %p150 = scmp.eq.s32.totalorder %s19, 3
      %p151 = por %p149, %p150
      %p153 = scmp.ne.s32.totalorder %s136, %s152
      %p154 = scmp.eq.s32.totalorder %s19, 0
      %p155 = por %p153, %p154
      %p156 = scmp.le.s32.totalorder 1, %s13
      %p157 = scmp.lt.s32.totalorder %s13, 5
      %p158 = pnand %p156, %p157
      %p159 = pneg %p158
      // Predicated region
      $region9: #{tpu_custom_call.1} parent=5 // pred_check
        _
      $region10: #{tpu_custom_call.1} parent=5 // pred_check_branch
        %161 = sbr.rel (%p158) target = $region12
      $region11: #{tpu_custom_call.1} parent=5 // pred_region
        %s162 = ssub.s32 %s13, 1
        // Predicated region
        $region13: #{tpu_custom_call.1} parent=11 // pred_check
          %p163 = pneg %p76
        $region14: #{tpu_custom_call.1} parent=11 // pred_check_branch
          %165 = sbr.rel (%p163) target = $region16
        $region15: #{tpu_custom_call.1} parent=11 // pred_region
          _
        $region16: #{tpu_custom_call.1} parent=11 // pred_fallthru
          _
        // Predicated region
        $region17: #{tpu_custom_call.1} parent=11 // pred_check
          %p166 = pneg %p97
        $region18: #{tpu_custom_call.1} parent=11 // pred_check_branch
          %168 = sbr.rel (%p166) target = $region20
        $region19: #{tpu_custom_call.1} parent=11 // pred_region
          _
        $region20: #{tpu_custom_call.1} parent=11 // pred_fallthru
          _
        // Predicated region
        $region21: #{tpu_custom_call.1} parent=11 // pred_check
          %p169 = pneg %p118
        $region22: #{tpu_custom_call.1} parent=11 // pred_check_branch
          %171 = sbr.rel (%p169) target = $region24
        $region23: #{tpu_custom_call.1} parent=11 // pred_region
          _
        $region24: #{tpu_custom_call.1} parent=11 // pred_fallthru
          _
      $region12: #{tpu_custom_call.1} parent=5 // pred_fallthru
        _
      %p172 = scmp.lt.s32.totalorder %s13, 4
      // Predicated region
      $region25: #{tpu_custom_call.1} parent=5 // pred_check
        %p173 = pneg %p172
      $region26: #{tpu_custom_call.1} parent=5 // pred_check_branch
        %175 = sbr.rel (%p173) target = $region28
      $region27: #{tpu_custom_call.1} parent=5 // pred_region
        // Predicated region
        $region29: #{tpu_custom_call.1} parent=27 // pred_check
          %p176 = pneg %p49
        $region30: #{tpu_custom_call.1} parent=27 // pred_check_branch
          %178 = sbr.rel (%p176) target = $region32
        $region31: #{tpu_custom_call.1} parent=27 // pred_region
          %s179 = smul.u32 %s20, 2
          %s180 = sadd.s32 %s179, %s21
          %p181 = scmp.lt.s32.totalorder %s180, 3
          %s182 = scalar_select %p181, %s180, 3
          %s183 = smul.addr %s182, 30
          %s184 = smul.addr %s183, 8
          %s185 = scalar_lea.vmem %s0, %s184
          %s186 = smul.u32 %s20, 2
          %s187 = sadd.s32 %s186, %s21
        $region32: #{tpu_custom_call.1} parent=27 // pred_fallthru
          _
      $region28: #{tpu_custom_call.1} parent=5 // pred_fallthru
        _
      %p188 = scmp.le.s32.totalorder 1, %s13
      %p189 = scmp.lt.s32.totalorder %s13, 5
      %p190 = pnand %p188, %p189
      %p191 = pneg %p190
      // Predicated region
      $region33: #{tpu_custom_call.1} parent=5 // pred_check
        _
      $region34: #{tpu_custom_call.1} parent=5 // pred_check_branch
        %193 = sbr.rel (%p190) target = $region36
      $region35: #{tpu_custom_call.1} parent=5 // pred_region
        %s194 = ssub.s32 %s13, 1
        %s195 = smul.u32 %s22, 2
        %s196 = sadd.s32 %s195, %s23
        %p197 = scmp.lt.s32.totalorder %s196, 3
        %s198 = scalar_select %p197, %s196, 3
        %s199 = smul.addr %s198, 30
        %s200 = smul.addr %s199, 8
        %s201 = scalar_lea.vmem %s0, %s200
        %p202 = pneg %p55
        %p203 = pneg %p52
        %p204 = pneg %p76
        %p205 = pneg %p73
        %p206 = pneg %p97
        %p207 = pneg %p94
        %p208 = pneg %p118
        %p209 = pneg %p115
        %p210 = pneg %p148
        %p211 = pneg %p145
        %s212 = sand.u32 %s135, 1
        %s213 = scalar_lea.sflag [#allocation3], %s212
        %s214 = sand.u32 %s135, 1
        %s215 = smul.addr %s214, 128
        %s216 = scalar_lea.vmem [#allocation2], %s215
        %s217 = smul.u32 %s22, 2
        %s218 = sadd.s32 %s217, %s23
        %p219 = scmp.lt.s32.totalorder %s218, 3
        %s220 = scalar_select %p219, %s218, 3
        %s221 = smul.addr %s220, 30
        %s222 = smul.addr %s221, 8
        %s223 = scalar_lea.vmem %s0, %s222
        %s224 = smul.u32 %s22, 2
        %s225 = sadd.s32 %s224, %s23
        %s226 = smul.u32 %s22, 2
        %s227 = sadd.s32 %s226, %s23
        %v228 = vld [vmem:[%s223] sm:$0xff]
        %v229 = vld [vmem:[%s223 + $0x8] sm:$0xff]
        %v230 = vld [vmem:[%s223 + $0x10] sm:$0x3]
        %v231 = vld [vmem:[%s223 + $0x18] sm:$0xff]
        %v232 = vld [vmem:[%s223 + $0x20] sm:$0xff]
        %v233 = vld [vmem:[%s223 + $0x28] sm:$0x3]
        %v234 = vld [vmem:[%s223 + $0x30] sm:$0xff]
        %v235 = vld [vmem:[%s223 + $0x38] sm:$0xff]
        %v236 = vld [vmem:[%s223 + $0x40] sm:$0x3]
        %v237 = vld [vmem:[%s223 + $0x48] sm:$0xff]
        %v238 = vld [vmem:[%s223 + $0x50] sm:$0xff]
        %v239 = vld [vmem:[%s223 + $0x58] sm:$0x3]
        %v240 = vld [vmem:[%s223 + $0x60] sm:$0xff]
        %v241 = vld [vmem:[%s223 + $0x68] sm:$0xff]
        %v242 = vld [vmem:[%s223 + $0x70] sm:$0x3]
        %v243 = vld [vmem:[%s223 + $0x78] sm:$0xff]
        %v244 = vld [vmem:[%s223 + $0x80] sm:$0xff]
        %v245 = vld [vmem:[%s223 + $0x88] sm:$0x3]
        %v246 = vld [vmem:[%s223 + $0x90] sm:$0xff]
        %v247 = vld [vmem:[%s223 + $0x98] sm:$0xff]
        %v248 = vld [vmem:[%s223 + $0xa0] sm:$0x3]
        %v249 = vld [vmem:[%s223 + $0xa8] sm:$0xff]
        %v250 = vld [vmem:[%s223 + $0xb0] sm:$0xff]
        %v251 = vld [vmem:[%s223 + $0xb8] sm:$0x3]
        %v252 = vld [vmem:[%s223 + $0xc0] sm:$0xff]
        %v253 = vld [vmem:[%s223 + $0xc8] sm:$0xff]
        %v254 = vld [vmem:[%s223 + $0xd0] sm:$0x3]
        %v255 = vld [vmem:[%s223 + $0xd8] sm:$0xff]
        %v256 = vld [vmem:[%s223 + $0xe0] sm:$0xff]
        %v257 = vld [vmem:[%s223 + $0xe8] sm:$0x3]
        %v258 = vld [vmem:[%s1] sm:$0xf]
        %vm283 = vcmask 1046528
        %v284 = vrot.slane %v228, 1
        %v285 = vrot.slane %v229, 1
        %v286 = vsel %vm283, %v284, %v285
        %v287 = vrot.slane %v230, 1
        %v288 = vsel %vm283, %v285, %v287
        %v289 = vrot.slane %v231, 1
        %v290 = vrot.slane %v232, 1
        %v291 = vsel %vm283, %v289, %v290
        %v292 = vrot.slane %v233, 1
        %v293 = vsel %vm283, %v290, %v292
        %v294 = vrot.slane %v234, 1
        %v295 = vrot.slane %v235, 1
        %v296 = vsel %vm283, %v294, %v295
        %v297 = vrot.slane %v236, 1
        %v298 = vsel %vm283, %v295, %v297
        %v299 = vrot.slane %v237, 1
        %v300 = vrot.slane %v238, 1
        %v301 = vsel %vm283, %v299, %v300
        %v302 = vrot.slane %v239, 1
        %v303 = vsel %vm283, %v300, %v302
        %v304 = vrot.slane %v240, 1
        %v305 = vrot.slane %v241, 1
        %v306 = vsel %vm283, %v304, %v305
        %v307 = vrot.slane %v242, 1
        %v308 = vsel %vm283, %v305, %v307
        %v309 = vrot.slane %v243, 1
        %v310 = vrot.slane %v244, 1
        %v311 = vsel %vm283, %v309, %v310
        %v312 = vrot.slane %v245, 1
        %v313 = vsel %vm283, %v310, %v312
        %v314 = vrot.slane %v246, 1
        %v315 = vrot.slane %v247, 1
        %v316 = vsel %vm283, %v314, %v315
        %v317 = vrot.slane %v248, 1
        %v318 = vsel %vm283, %v315, %v317
        %v319 = vrot.slane %v249, 1
        %v320 = vrot.slane %v250, 1
        %v321 = vsel %vm283, %v319, %v320
        %v322 = vrot.slane %v251, 1
        %v323 = vsel %vm283, %v320, %v322
        %s324 = scalar_lea.vmem %s1, 4
        %v325 = vld [vmem:[%s324] sm:$0xf]
        %vm326 = vcmask 31744
        %v327 = vsel %vm326, %v286, 0
        %v329 = vsel %vm326, %v288, 0
        %v331 = vsel %vm326, %v291, 0
        %v333 = vsel %vm326, %v293, 0
        %v335 = vsel %vm326, %v296, 0
        %v337 = vsel %vm326, %v298, 0
        %v339 = vsel %vm326, %v301, 0
        %v341 = vsel %vm326, %v303, 0
        %v343 = vsel %vm326, %v306, 0
        %v345 = vsel %vm326, %v308, 0
        %v347 = vsel %vm326, %v311, 0
        %v349 = vsel %vm326, %v313, 0
        %v351 = vsel %vm326, %v316, 0
        %v353 = vsel %vm326, %v318, 0
        %v355 = vsel %vm326, %v321, 0
        %v357 = vsel %vm326, %v323, 0
        %vm359 = vcmask 1043456
        %v361 = vsel %vm359, %v325, 0
        %363 = vmatprep.subr.mxu0 0.0
        %364 = vmatpush1.msra.mxu0 %v361
        %365 = vmatprep.subr.mxu0 0.0
        %366 = vmatpush1.msra.mxu0 0.0
        %367 = vmatprep.subr.mxu0 0.0
        %368 = vmatpush1.msra.mxu0 0.0
        %369 = vmatprep.subr.mxu0 0.0
        %370 = vmatpush1.msra.mxu0 0.0
        %371 = vmatprep.subr.mxu0 0.0
        %372 = vmatpush1.msra.mxu0 0.0
        %373 = vmatprep.subr.mxu0 0.0
        %374 = vmatpush1.msra.mxu0 0.0
        %375 = vmatprep.subr.mxu0 0.0
        %376 = vmatpush1.msra.mxu0 0.0
        %377 = vmatprep.subr.mxu0 0.0
        %378 = vmatpush1.msra.mxu0 0.0
        %379 = vmatprep.subr.mxu0 0.0
        %380 = vmatpush1.msra.mxu0 0.0
        %381 = vmatprep.subr.mxu0 0.0
        %382 = vmatpush1.msra.mxu0 0.0
        %383 = vmatprep.subr.mxu0 0.0
        %384 = vmatpush1.msra.mxu0 0.0
        %385 = vmatprep.subr.mxu0 0.0
        %386 = vmatpush1.msra.mxu0 0.0
        %387 = vmatprep.subr.mxu0 0.0
        %388 = vmatpush1.msra.mxu0 0.0
        %389 = vmatprep.subr.mxu0 0.0
        %390 = vmatpush1.msra.mxu0 0.0
        %391 = vmatprep.subr.mxu0 0.0
        %392 = vmatpush1.msra.mxu0 0.0
        %393 = vmatprep.subr.mxu0 0.0
        %394 = vmatpush1.msra.mxu0 0.0
        %395 = vmatprep.subr.mxu0 0.0
        %396 = vmatpush1.msra.mxu0 0.0
        %397 = vmatprep.subr.mxu0 0.0
        %398 = vmatpush1.msra.mxu0 0.0
        %399 = vmatprep.subr.mxu0 0.0
        %400 = vmatpush1.msra.mxu0 0.0
        %401 = vmatprep.subr.mxu0 0.0
        %402 = vmatpush1.msra.mxu0 0.0
        %403 = vmatprep.subr.mxu0 0.0
        %404 = vmatpush1.msra.mxu0 0.0
        %405 = vmatprep.subr.mxu0 0.0
        %406 = vmatpush1.msra.mxu0 0.0
        %407 = vmatprep.subr.mxu0 0.0
        %408 = vmatpush1.msra.mxu0 0.0
        %409 = vmatprep.subr.mxu0 0.0
        %410 = vmatpush1.msra.mxu0 0.0
        %411 = vmatprep.subr.mxu0 0.0
        %412 = vmatpush1.msra.mxu0 0.0
        %413 = vmatprep.subr.mxu0 0.0
        %414 = vmatpush1.msra.mxu0 0.0
        %415 = vmatprep.subr.mxu0 0.0
        %416 = vmatpush1.msra.mxu0 0.0
        %417 = vmatprep.subr.mxu0 0.0
        %418 = vmatpush1.msra.mxu0 0.0
        %419 = vmatprep.subr.mxu0 0.0
        %420 = vmatpush1.msra.mxu0 0.0
        %421 = vmatprep.subr.mxu0 0.0
        %422 = vmatpush1.msra.mxu0 0.0
        %423 = vmatprep.subr.mxu0 0.0
        %424 = vmatpush1.msra.mxu0 0.0
        %425 = vmatprep.subr.mxu0 0.0
        %426 = vmatpush1.msra.mxu0 0.0
        %427 = vmatprep.mubr.f32.mxu0 0.0
        %428 = vmatmul.mubr.f32.gmra.mrb[0].mxu0 %v327
        %v429 = vpop.f32.mrb[0].mxu0
        %v430 = vadd.f32 0.0, %v429
        %v431 = vpop.f32.mrb[0].mxu0
        %432 = vmatprep.mubr.f32.mxu0 0.0
        %433 = vmatmul.mubr.f32.gmra.mrb[0].mxu0 %v329
        %v434 = vpop.f32.mrb[0].mxu0
        %v435 = vadd.f32 0.0, %v434
        %v436 = vpop.f32.mrb[0].mxu0
        %437 = vmatprep.mubr.f32.mxu0 0.0
        %438 = vmatmul.mubr.f32.gmra.mrb[0].mxu0 %v331
        %v439 = vpop.f32.mrb[0].mxu0
        %v440 = vadd.f32 0.0, %v439
        %v441 = vpop.f32.mrb[0].mxu0
        %442 = vmatprep.mubr.f32.mxu0 0.0
        %443 = vmatmul.mubr.f32.gmra.mrb[0].mxu0 %v333
        %v444 = vpop.f32.mrb[0].mxu0
        %v445 = vadd.f32 0.0, %v444
        %v446 = vpop.f32.mrb[0].mxu0
        %447 = vmatprep.mubr.f32.mxu0 0.0
        %448 = vmatmul.mubr.f32.gmra.mrb[0].mxu0 %v335
        %v449 = vpop.f32.mrb[0].mxu0
        %v450 = vadd.f32 0.0, %v449
        %v451 = vpop.f32.mrb[0].mxu0
        %452 = vmatprep.mubr.f32.mxu0 0.0
        %453 = vmatmul.mubr.f32.gmra.mrb[0].mxu0 %v337
        %v454 = vpop.f32.mrb[0].mxu0
        %v455 = vadd.f32 0.0, %v454
        %v456 = vpop.f32.mrb[0].mxu0
        %457 = vmatprep.mubr.f32.mxu0 0.0
        %458 = vmatmul.mubr.f32.gmra.mrb[0].mxu0 %v339
        %v459 = vpop.f32.mrb[0].mxu0
        %v460 = vadd.f32 0.0, %v459
        %v461 = vpop.f32.mrb[0].mxu0
        %462 = vmatprep.mubr.f32.mxu0 0.0
        %463 = vmatmul.mubr.f32.gmra.mrb[0].mxu0 %v341
        %v464 = vpop.f32.mrb[0].mxu0
        %v465 = vadd.f32 0.0, %v464
        %v466 = vpop.f32.mrb[0].mxu0
        %467 = vmatprep.mubr.f32.mxu0 0.0
        %468 = vmatmul.mubr.f32.gmra.mrb[0].mxu0 %v343
        %v469 = vpop.f32.mrb[0].mxu0
        %v470 = vadd.f32 0.0, %v469
        %v471 = vpop.f32.mrb[0].mxu0
        %472 = vmatprep.mubr.f32.mxu0 0.0
        %473 = vmatmul.mubr.f32.gmra.mrb[0].mxu0 %v345
        %v474 = vpop.f32.mrb[0].mxu0
        %v475 = vadd.f32 0.0, %v474
        %v476 = vpop.f32.mrb[0].mxu0
        %477 = vmatprep.mubr.f32.mxu0 0.0
        %478 = vmatmul.mubr.f32.gmra.mrb[0].mxu0 %v347
        %v479 = vpop.f32.mrb[0].mxu0
        %v480 = vadd.f32 0.0, %v479
        %v481 = vpop.f32.mrb[0].mxu0
        %482 = vmatprep.mubr.f32.mxu0 0.0
        %483 = vmatmul.mubr.f32.gmra.mrb[0].mxu0 %v349
        %v484 = vpop.f32.mrb[0].mxu0
        %v485 = vadd.f32 0.0, %v484
        %v486 = vpop.f32.mrb[0].mxu0
        %487 = vmatprep.mubr.f32.mxu0 0.0
        %488 = vmatmul.mubr.f32.gmra.mrb[0].mxu0 %v351
        %v489 = vpop.f32.mrb[0].mxu0
        %v490 = vadd.f32 0.0, %v489
        %v491 = vpop.f32.mrb[0].mxu0
        %492 = vmatprep.mubr.f32.mxu0 0.0
        %493 = vmatmul.mubr.f32.gmra.mrb[0].mxu0 %v353
        %v494 = vpop.f32.mrb[0].mxu0
        %v495 = vadd.f32 0.0, %v494
        %v496 = vpop.f32.mrb[0].mxu0
        %497 = vmatprep.mubr.f32.mxu0 0.0
        %498 = vmatmul.mubr.f32.gmra.mrb[0].mxu0 %v355
        %v499 = vpop.f32.mrb[0].mxu0
        %v500 = vadd.f32 0.0, %v499
        %v501 = vpop.f32.mrb[0].mxu0
        %502 = vmatprep.mubr.f32.mxu0 0.0
        %503 = vmatmul.mubr.f32.gmra.mrb[0].mxu0 %v357
        %v504 = vpop.f32.mrb[0].mxu0
        %v505 = vadd.f32 0.0, %v504
        %v506 = vpop.f32.mrb[0].mxu0
        %507 = vdwg.mxu0
        %v508 = vsel %vm326, %v228, 0
        %v510 = vsel %vm326, %v229, 0
        %v512 = vsel %vm326, %v231, 0
        %v514 = vsel %vm326, %v232, 0
        %v516 = vsel %vm326, %v234, 0
        %v518 = vsel %vm326, %v235, 0
        %v520 = vsel %vm326, %v237, 0
        %v522 = vsel %vm326, %v238, 0
        %v524 = vsel %vm326, %v240, 0
        %v526 = vsel %vm326, %v241, 0
        %v528 = vsel %vm326, %v243, 0
        %v530 = vsel %vm326, %v244, 0
        %v532 = vsel %vm326, %v246, 0
        %v534 = vsel %vm326, %v247, 0
        %v536 = vsel %vm326, %v249, 0
        %v538 = vsel %vm326, %v250, 0
        %v541 = vsel %vm359, %v258, 0
        %543 = vmatprep.subr.mxu0 0.0
        %544 = vmatpush1.msra.mxu0 %v541
        %545 = vmatprep.subr.mxu0 0.0
        %546 = vmatpush1.msra.mxu0 0.0
        %547 = vmatprep.subr.mxu0 0.0
        %548 = vmatpush1.msra.mxu0 0.0
        %549 = vmatprep.subr.mxu0 0.0
        %550 = vmatpush1.msra.mxu0 0.0
        %551 = vmatprep.subr.mxu0 0.0
        %552 = vmatpush1.msra.mxu0 0.0
        %553 = vmatprep.subr.mxu0 0.0
        %554 = vmatpush1.msra.mxu0 0.0
        %555 = vmatprep.subr.mxu0 0.0
        %556 = vmatpush1.msra.mxu0 0.0
        %557 = vmatprep.subr.mxu0 0.0
        %558 = vmatpush1.msra.mxu0 0.0
        %559 = vmatprep.subr.mxu0 0.0
        %560 = vmatpush1.msra.mxu0 0.0
        %561 = vmatprep.subr.mxu0 0.0
        %562 = vmatpush1.msra.mxu0 0.0
        %563 = vmatprep.subr.mxu0 0.0
        %564 = vmatpush1.msra.mxu0 0.0
        %565 = vmatprep.subr.mxu0 0.0
        %566 = vmatpush1.msra.mxu0 0.0
        %567 = vmatprep.subr.mxu0 0.0
        %568 = vmatpush1.msra.mxu0 0.0
        %569 = vmatprep.subr.mxu0 0.0
        %570 = vmatpush1.msra.mxu0 0.0
        %571 = vmatprep.subr.mxu0 0.0
        %572 = vmatpush1.msra.mxu0 0.0
        %573 = vmatprep.subr.mxu0 0.0
        %574 = vmatpush1.msra.mxu0 0.0
        %575 = vmatprep.subr.mxu0 0.0
        %576 = vmatpush1.msra.mxu0 0.0
        %577 = vmatprep.subr.mxu0 0.0
        %578 = vmatpush1.msra.mxu0 0.0
        %579 = vmatprep.subr.mxu0 0.0
        %580 = vmatpush1.msra.mxu0 0.0
        %581 = vmatprep.subr.mxu0 0.0
        %582 = vmatpush1.msra.mxu0 0.0
        %583 = vmatprep.subr.mxu0 0.0
        %584 = vmatpush1.msra.mxu0 0.0
        %585 = vmatprep.subr.mxu0 0.0
        %586 = vmatpush1.msra.mxu0 0.0
        %587 = vmatprep.subr.mxu0 0.0
        %588 = vmatpush1.msra.mxu0 0.0
        %589 = vmatprep.subr.mxu0 0.0
        %590 = vmatpush1.msra.mxu0 0.0
        %591 = vmatprep.subr.mxu0 0.0
        %592 = vmatpush1.msra.mxu0 0.0
        %593 = vmatprep.subr.mxu0 0.0
        %594 = vmatpush1.msra.mxu0 0.0
        %595 = vmatprep.subr.mxu0 0.0
        %596 = vmatpush1.msra.mxu0 0.0
        %597 = vmatprep.subr.mxu0 0.0
        %598 = vmatpush1.msra.mxu0 0.0
        %599 = vmatprep.subr.mxu0 0.0
        %600 = vmatpush1.msra.mxu0 0.0
        %601 = vmatprep.subr.mxu0 0.0
        %602 = vmatpush1.msra.mxu0 0.0
        %603 = vmatprep.subr.mxu0 0.0
        %604 = vmatpush1.msra.mxu0 0.0
        %605 = vmatprep.subr.mxu0 0.0
        %606 = vmatpush1.msra.mxu0 0.0
        %607 = vmatprep.mubr.f32.mxu0 0.0
        %608 = vmatmul.mubr.f32.gmra.mrb[0].mxu0 %v508
        %v609 = vpop.f32.mrb[0].mxu0
        %v610 = vadd.f32 %v430, %v609
        %v611 = vpop.f32.mrb[0].mxu0
        %612 = vmatprep.mubr.f32.mxu0 0.0
        %613 = vmatmul.mubr.f32.gmra.mrb[0].mxu0 %v510
        %v614 = vpop.f32.mrb[0].mxu0
        %v615 = vadd.f32 %v435, %v614
        %v616 = vpop.f32.mrb[0].mxu0
        %617 = vmatprep.mubr.f32.mxu0 0.0
        %618 = vmatmul.mubr.f32.gmra.mrb[0].mxu0 %v512
        %v619 = vpop.f32.mrb[0].mxu0
        %v620 = vadd.f32 %v440, %v619
        %v621 = vpop.f32.mrb[0].mxu0
        %622 = vmatprep.mubr.f32.mxu0 0.0
        %623 = vmatmul.mubr.f32.gmra.mrb[0].mxu0 %v514
        %v624 = vpop.f32.mrb[0].mxu0
        %v625 = vadd.f32 %v445, %v624
        %v626 = vpop.f32.mrb[0].mxu0
        %627 = vmatprep.mubr.f32.mxu0 0.0
        %628 = vmatmul.mubr.f32.gmra.mrb[0].mxu0 %v516
        %v629 = vpop.f32.mrb[0].mxu0
        %v630 = vadd.f32 %v450, %v629
        %v631 = vpop.f32.mrb[0].mxu0
        %632 = vmatprep.mubr.f32.mxu0 0.0
        %633 = vmatmul.mubr.f32.gmra.mrb[0].mxu0 %v518
        %v634 = vpop.f32.mrb[0].mxu0
        %v635 = vadd.f32 %v455, %v634
        %v636 = vpop.f32.mrb[0].mxu0
        %637 = vmatprep.mubr.f32.mxu0 0.0
        %638 = vmatmul.mubr.f32.gmra.mrb[0].mxu0 %v520
        %v639 = vpop.f32.mrb[0].mxu0
        %v640 = vadd.f32 %v460, %v639
        %v641 = vpop.f32.mrb[0].mxu0
        %642 = vmatprep.mubr.f32.mxu0 0.0
        %643 = vmatmul.mubr.f32.gmra.mrb[0].mxu0 %v522
        %v644 = vpop.f32.mrb[0].mxu0
        %v645 = vadd.f32 %v465, %v644
        %v646 = vpop.f32.mrb[0].mxu0
        %647 = vmatprep.mubr.f32.mxu0 0.0
        %648 = vmatmul.mubr.f32.gmra.mrb[0].mxu0 %v524
        %v649 = vpop.f32.mrb[0].mxu0
        %v650 = vadd.f32 %v470, %v649
        %v651 = vpop.f32.mrb[0].mxu0
        %652 = vmatprep.mubr.f32.mxu0 0.0
        %653 = vmatmul.mubr.f32.gmra.mrb[0].mxu0 %v526
        %v654 = vpop.f32.mrb[0].mxu0
        %v655 = vadd.f32 %v475, %v654
        %v656 = vpop.f32.mrb[0].mxu0
        %657 = vmatprep.mubr.f32.mxu0 0.0
        %658 = vmatmul.mubr.f32.gmra.mrb[0].mxu0 %v528
        %v659 = vpop.f32.mrb[0].mxu0
        %v660 = vadd.f32 %v480, %v659
        %v661 = vpop.f32.mrb[0].mxu0
        %662 = vmatprep.mubr.f32.mxu0 0.0
        %663 = vmatmul.mubr.f32.gmra.mrb[0].mxu0 %v530
        %v664 = vpop.f32.mrb[0].mxu0
        %v665 = vadd.f32 %v485, %v664
        %v666 = vpop.f32.mrb[0].mxu0
        %667 = vmatprep.mubr.f32.mxu0 0.0
        %668 = vmatmul.mubr.f32.gmra.mrb[0].mxu0 %v532
        %v669 = vpop.f32.mrb[0].mxu0
        %v670 = vadd.f32 %v490, %v669
        %v671 = vpop.f32.mrb[0].mxu0
        %672 = vmatprep.mubr.f32.mxu0 0.0
        %673 = vmatmul.mubr.f32.gmra.mrb[0].mxu0 %v534
        %v674 = vpop.f32.mrb[0].mxu0
        %v675 = vadd.f32 %v495, %v674
        %v676 = vpop.f32.mrb[0].mxu0
        %677 = vmatprep.mubr.f32.mxu0 0.0
        %678 = vmatmul.mubr.f32.gmra.mrb[0].mxu0 %v536
        %v679 = vpop.f32.mrb[0].mxu0
        %v680 = vadd.f32 %v500, %v679
        %v681 = vpop.f32.mrb[0].mxu0
        %682 = vmatprep.mubr.f32.mxu0 0.0
        %683 = vmatmul.mubr.f32.gmra.mrb[0].mxu0 %v538
        %v684 = vpop.f32.mrb[0].mxu0
        %v685 = vadd.f32 %v505, %v684
        %v686 = vpop.f32.mrb[0].mxu0
        %687 = vdwg.mxu0
        %vm688 = vcmask 1045504
        %v689 = vrot.slane %v228, 2
        %v690 = vrot.slane %v229, 2
        %v691 = vsel %vm688, %v689, %v690
        %v692 = vrot.slane %v230, 2
        %v693 = vsel %vm688, %v690, %v692
        %v694 = vrot.slane %v231, 2
        %v695 = vrot.slane %v232, 2
        %v696 = vsel %vm688, %v694, %v695
        %v697 = vrot.slane %v233, 2
        %v698 = vsel %vm688, %v695, %v697
        %v699 = vrot.slane %v234, 2
        %v700 = vrot.slane %v235, 2
        %v701 = vsel %vm688, %v699, %v700
        %v702 = vrot.slane %v236, 2
        %v703 = vsel %vm688, %v700, %v702
        %v704 = vrot.slane %v237, 2
        %v705 = vrot.slane %v238, 2
        %v706 = vsel %vm688, %v704, %v705
        %v707 = vrot.slane %v239, 2
        %v708 = vsel %vm688, %v705, %v707
        %v709 = vrot.slane %v240, 2
        %v710 = vrot.slane %v241, 2
        %v711 = vsel %vm688, %v709, %v710
        %v712 = vrot.slane %v242, 2
        %v713 = vsel %vm688, %v710, %v712
        %v714 = vrot.slane %v243, 2
        %v715 = vrot.slane %v244, 2
        %v716 = vsel %vm688, %v714, %v715
        %v717 = vrot.slane %v245, 2
        %v718 = vsel %vm688, %v715, %v717
        %v719 = vrot.slane %v246, 2
        %v720 = vrot.slane %v247, 2
        %v721 = vsel %vm688, %v719, %v720
        %v722 = vrot.slane %v248, 2
        %v723 = vsel %vm688, %v720, %v722
        %v724 = vrot.slane %v249, 2
        %v725 = vrot.slane %v250, 2
        %v726 = vsel %vm688, %v724, %v725
        %v727 = vrot.slane %v251, 2
        %v728 = vsel %vm688, %v725, %v727
        %s729 = scalar_lea.vmem %s1, 8
        %v730 = vld [vmem:[%s729] sm:$0xf]
        %v731 = vsel %vm326, %v691, 0
        %v733 = vsel %vm326, %v693, 0
        %v735 = vsel %vm326, %v696, 0
        %v737 = vsel %vm326, %v698, 0
        %v739 = vsel %vm326, %v701, 0
        %v741 = vsel %vm326, %v703, 0
        %v743 = vsel %vm326, %v706, 0
        %v745 = vsel %vm326, %v708, 0
        %v747 = vsel %vm326, %v711, 0
        %v749 = vsel %vm326, %v713, 0
        %v751 = vsel %vm326, %v716, 0
        %v753 = vsel %vm326, %v718, 0
        %v755 = vsel %vm326, %v721, 0
        %v757 = vsel %vm326, %v723, 0
        %v759 = vsel %vm326, %v726, 0
        %v761 = vsel %vm326, %v728, 0
        %v764 = vsel %vm359, %v730, 0
        %766 = vmatprep.subr.mxu0 0.0
        %767 = vmatpush1.msra.mxu0 %v764
        %768 = vmatprep.subr.mxu0 0.0
        %769 = vmatpush1.msra.mxu0 0.0
        %770 = vmatprep.subr.mxu0 0.0
        %771 = vmatpush1.msra.mxu0 0.0
        %772 = vmatprep.subr.mxu0 0.0
        %773 = vmatpush1.msra.mxu0 0.0
        %774 = vmatprep.subr.mxu0 0.0
        %775 = vmatpush1.msra.mxu0 0.0
        %776 = vmatprep.subr.mxu0 0.0
        %777 = vmatpush1.msra.mxu0 0.0
        %778 = vmatprep.subr.mxu0 0.0
        %779 = vmatpush1.msra.mxu0 0.0
        %780 = vmatprep.subr.mxu0 0.0
        %781 = vmatpush1.msra.mxu0 0.0
        %782 = vmatprep.subr.mxu0 0.0
        %783 = vmatpush1.msra.mxu0 0.0
        %784 = vmatprep.subr.mxu0 0.0
        %785 = vmatpush1.msra.mxu0 0.0
        %786 = vmatprep.subr.mxu0 0.0
        %787 = vmatpush1.msra.mxu0 0.0
        %788 = vmatprep.subr.mxu0 0.0
        %789 = vmatpush1.msra.mxu0 0.0
        %790 = vmatprep.subr.mxu0 0.0
        %791 = vmatpush1.msra.mxu0 0.0
        %792 = vmatprep.subr.mxu0 0.0
        %793 = vmatpush1.msra.mxu0 0.0
        %794 = vmatprep.subr.mxu0 0.0
        %795 = vmatpush1.msra.mxu0 0.0
        %796 = vmatprep.subr.mxu0 0.0
        %797 = vmatpush1.msra.mxu0 0.0
        %798 = vmatprep.subr.mxu0 0.0
        %799 = vmatpush1.msra.mxu0 0.0
        %800 = vmatprep.subr.mxu0 0.0
        %801 = vmatpush1.msra.mxu0 0.0
        %802 = vmatprep.subr.mxu0 0.0
        %803 = vmatpush1.msra.mxu0 0.0
        %804 = vmatprep.subr.mxu0 0.0
        %805 = vmatpush1.msra.mxu0 0.0
        %806 = vmatprep.subr.mxu0 0.0
        %807 = vmatpush1.msra.mxu0 0.0
        %808 = vmatprep.subr.mxu0 0.0
        %809 = vmatpush1.msra.mxu0 0.0
        %810 = vmatprep.subr.mxu0 0.0
        %811 = vmatpush1.msra.mxu0 0.0
        %812 = vmatprep.subr.mxu0 0.0
        %813 = vmatpush1.msra.mxu0 0.0
        %814 = vmatprep.subr.mxu0 0.0
        %815 = vmatpush1.msra.mxu0 0.0
        %816 = vmatprep.subr.mxu0 0.0
        %817 = vmatpush1.msra.mxu0 0.0
        %818 = vmatprep.subr.mxu0 0.0
        %819 = vmatpush1.msra.mxu0 0.0
        %820 = vmatprep.subr.mxu0 0.0
        %821 = vmatpush1.msra.mxu0 0.0
        %822 = vmatprep.subr.mxu0 0.0
        %823 = vmatpush1.msra.mxu0 0.0
        %824 = vmatprep.subr.mxu0 0.0
        %825 = vmatpush1.msra.mxu0 0.0
        %826 = vmatprep.subr.mxu0 0.0
        %827 = vmatpush1.msra.mxu0 0.0
        %828 = vmatprep.subr.mxu0 0.0
        %829 = vmatpush1.msra.mxu0 0.0
        %830 = vmatprep.mubr.f32.mxu0 0.0
        %831 = vmatmul.mubr.f32.gmra.mrb[0].mxu0 %v731
        %v832 = vpop.f32.mrb[0].mxu0
        %v833 = vadd.f32 0.0, %v832
        %v834 = vpop.f32.mrb[0].mxu0
        %835 = vmatprep.mubr.f32.mxu0 0.0
        %836 = vmatmul.mubr.f32.gmra.mrb[0].mxu0 %v733
        %v837 = vpop.f32.mrb[0].mxu0
        %v838 = vadd.f32 0.0, %v837
        %v839 = vpop.f32.mrb[0].mxu0
        %840 = vmatprep.mubr.f32.mxu0 0.0
        %841 = vmatmul.mubr.f32.gmra.mrb[0].mxu0 %v735
        %v842 = vpop.f32.mrb[0].mxu0
        %v843 = vadd.f32 0.0, %v842
        %v844 = vpop.f32.mrb[0].mxu0
        %845 = vmatprep.mubr.f32.mxu0 0.0
        %846 = vmatmul.mubr.f32.gmra.mrb[0].mxu0 %v737
        %v847 = vpop.f32.mrb[0].mxu0
        %v848 = vadd.f32 0.0, %v847
        %v849 = vpop.f32.mrb[0].mxu0
        %850 = vmatprep.mubr.f32.mxu0 0.0
        %851 = vmatmul.mubr.f32.gmra.mrb[0].mxu0 %v739
        %v852 = vpop.f32.mrb[0].mxu0
        %v853 = vadd.f32 0.0, %v852
        %v854 = vpop.f32.mrb[0].mxu0
        %855 = vmatprep.mubr.f32.mxu0 0.0
        %856 = vmatmul.mubr.f32.gmra.mrb[0].mxu0 %v741
        %v857 = vpop.f32.mrb[0].mxu0
        %v858 = vadd.f32 0.0, %v857
        %v859 = vpop.f32.mrb[0].mxu0
        %860 = vmatprep.mubr.f32.mxu0 0.0
        %861 = vmatmul.mubr.f32.gmra.mrb[0].mxu0 %v743
        %v862 = vpop.f32.mrb[0].mxu0
        %v863 = vadd.f32 0.0, %v862
        %v864 = vpop.f32.mrb[0].mxu0
        %865 = vmatprep.mubr.f32.mxu0 0.0
        %866 = vmatmul.mubr.f32.gmra.mrb[0].mxu0 %v745
        %v867 = vpop.f32.mrb[0].mxu0
        %v868 = vadd.f32 0.0, %v867
        %v869 = vpop.f32.mrb[0].mxu0
        %870 = vmatprep.mubr.f32.mxu0 0.0
        %871 = vmatmul.mubr.f32.gmra.mrb[0].mxu0 %v747
        %v872 = vpop.f32.mrb[0].mxu0
        %v873 = vadd.f32 0.0, %v872
        %v874 = vpop.f32.mrb[0].mxu0
        %875 = vmatprep.mubr.f32.mxu0 0.0
        %876 = vmatmul.mubr.f32.gmra.mrb[0].mxu0 %v749
        %v877 = vpop.f32.mrb[0].mxu0
        %v878 = vadd.f32 0.0, %v877
        %v879 = vpop.f32.mrb[0].mxu0
        %880 = vmatprep.mubr.f32.mxu0 0.0
        %881 = vmatmul.mubr.f32.gmra.mrb[0].mxu0 %v751
        %v882 = vpop.f32.mrb[0].mxu0
        %v883 = vadd.f32 0.0, %v882
        %v884 = vpop.f32.mrb[0].mxu0
        %885 = vmatprep.mubr.f32.mxu0 0.0
        %886 = vmatmul.mubr.f32.gmra.mrb[0].mxu0 %v753
        %v887 = vpop.f32.mrb[0].mxu0
        %v888 = vadd.f32 0.0, %v887
        %v889 = vpop.f32.mrb[0].mxu0
        %890 = vmatprep.mubr.f32.mxu0 0.0
        %891 = vmatmul.mubr.f32.gmra.mrb[0].mxu0 %v755
        %v892 = vpop.f32.mrb[0].mxu0
        %v893 = vadd.f32 0.0, %v892
        %v894 = vpop.f32.mrb[0].mxu0
        %895 = vmatprep.mubr.f32.mxu0 0.0
        %896 = vmatmul.mubr.f32.gmra.mrb[0].mxu0 %v757
        %v897 = vpop.f32.mrb[0].mxu0
        %v898 = vadd.f32 0.0, %v897
        %v899 = vpop.f32.mrb[0].mxu0
        %900 = vmatprep.mubr.f32.mxu0 0.0
        %901 = vmatmul.mubr.f32.gmra.mrb[0].mxu0 %v759
        %v902 = vpop.f32.mrb[0].mxu0
        %v903 = vadd.f32 0.0, %v902
        %v904 = vpop.f32.mrb[0].mxu0
        %905 = vmatprep.mubr.f32.mxu0 0.0
        %906 = vmatmul.mubr.f32.gmra.mrb[0].mxu0 %v761
        %v907 = vpop.f32.mrb[0].mxu0
        %v908 = vadd.f32 0.0, %v907
        %v909 = vpop.f32.mrb[0].mxu0
        %910 = vdwg.mxu0
        %v911 = vadd.f32 %v610, %v833
        %v912 = vadd.f32 %v615, %v838
        %v913 = vadd.f32 %v620, %v843
        %v914 = vadd.f32 %v625, %v848
        %v915 = vadd.f32 %v630, %v853
        %v916 = vadd.f32 %v635, %v858
        %v917 = vadd.f32 %v640, %v863
        %v918 = vadd.f32 %v645, %v868
        %v919 = vadd.f32 %v650, %v873
        %v920 = vadd.f32 %v655, %v878
        %v921 = vadd.f32 %v660, %v883
        %v922 = vadd.f32 %v665, %v888
        %v923 = vadd.f32 %v670, %v893
        %v924 = vadd.f32 %v675, %v898
        %v925 = vadd.f32 %v680, %v903
        %v926 = vadd.f32 %v685, %v908
        %s927 = scalar_lea.vmem %s1, 12
        %v928 = vld [vmem:[%s927] sm:$0xf]
        %v930 = vsel %vm326, %v252, 0
        %v933 = vsel %vm326, %v253, 0
        %v936 = vsel %vm359, %v928, 0
        %938 = vmatprep.subr.mxu0 0.0
        %939 = vmatpush1.msra.mxu0 %v936
        %940 = vmatprep.subr.mxu0 0.0
        %941 = vmatpush1.msra.mxu0 0.0
        %942 = vmatprep.subr.mxu0 0.0
        %943 = vmatpush1.msra.mxu0 0.0
        %944 = vmatprep.subr.mxu0 0.0
        %945 = vmatpush1.msra.mxu0 0.0
        %946 = vmatprep.subr.mxu0 0.0
        %947 = vmatpush1.msra.mxu0 0.0
        %948 = vmatprep.subr.mxu0 0.0
        %949 = vmatpush1.msra.mxu0 0.0
        %950 = vmatprep.subr.mxu0 0.0
        %951 = vmatpush1.msra.mxu0 0.0
        %952 = vmatprep.subr.mxu0 0.0
        %953 = vmatpush1.msra.mxu0 0.0
        %954 = vmatprep.subr.mxu0 0.0
        %955 = vmatpush1.msra.mxu0 0.0
        %956 = vmatprep.subr.mxu0 0.0
        %957 = vmatpush1.msra.mxu0 0.0
        %958 = vmatprep.subr.mxu0 0.0
        %959 = vmatpush1.msra.mxu0 0.0
        %960 = vmatprep.subr.mxu0 0.0
        %961 = vmatpush1.msra.mxu0 0.0
        %962 = vmatprep.subr.mxu0 0.0
        %963 = vmatpush1.msra.mxu0 0.0
        %964 = vmatprep.subr.mxu0 0.0
        %965 = vmatpush1.msra.mxu0 0.0
        %966 = vmatprep.subr.mxu0 0.0
        %967 = vmatpush1.msra.mxu0 0.0
        %968 = vmatprep.subr.mxu0 0.0
        %969 = vmatpush1.msra.mxu0 0.0
        %970 = vmatprep.subr.mxu0 0.0
        %971 = vmatpush1.msra.mxu0 0.0
        %972 = vmatprep.subr.mxu0 0.0
        %973 = vmatpush1.msra.mxu0 0.0
        %974 = vmatprep.subr.mxu0 0.0
        %975 = vmatpush1.msra.mxu0 0.0
        %976 = vmatprep.subr.mxu0 0.0
        %977 = vmatpush1.msra.mxu0 0.0
        %978 = vmatprep.subr.mxu0 0.0
        %979 = vmatpush1.msra.mxu0 0.0
        %980 = vmatprep.subr.mxu0 0.0
        %981 = vmatpush1.msra.mxu0 0.0
        %982 = vmatprep.subr.mxu0 0.0
        %983 = vmatpush1.msra.mxu0 0.0
        %984 = vmatprep.subr.mxu0 0.0
        %985 = vmatpush1.msra.mxu0 0.0
        %986 = vmatprep.subr.mxu0 0.0
        %987 = vmatpush1.msra.mxu0 0.0
        %988 = vmatprep.subr.mxu0 0.0
        %989 = vmatpush1.msra.mxu0 0.0
        %990 = vmatprep.subr.mxu0 0.0
        %991 = vmatpush1.msra.mxu0 0.0
        %992 = vmatprep.subr.mxu0 0.0
        %993 = vmatpush1.msra.mxu0 0.0
        %994 = vmatprep.subr.mxu0 0.0
        %995 = vmatpush1.msra.mxu0 0.0
        %996 = vmatprep.subr.mxu0 0.0
        %997 = vmatpush1.msra.mxu0 0.0
        %998 = vmatprep.subr.mxu0 0.0
        %999 = vmatpush1.msra.mxu0 0.0
        %1000 = vmatprep.subr.mxu0 0.0
        %1001 = vmatpush1.msra.mxu0 0.0
        %1002 = vmatprep.mubr.f32.mxu0 0.0
        %1003 = vmatmul.mubr.f32.gmra.mrb[0].mxu0 %v512
        %v1004 = vpop.f32.mrb[0].mxu0
        %v1005 = vadd.f32 0.0, %v1004
        %v1006 = vpop.f32.mrb[0].mxu0
        %1007 = vmatprep.mubr.f32.mxu0 0.0
        %1008 = vmatmul.mubr.f32.gmra.mrb[0].mxu0 %v514
        %v1009 = vpop.f32.mrb[0].mxu0
        %v1010 = vadd.f32 0.0, %v1009
        %v1011 = vpop.f32.mrb[0].mxu0
        %1012 = vmatprep.mubr.f32.mxu0 0.0
        %1013 = vmatmul.mubr.f32.gmra.mrb[0].mxu0 %v516
        %v1014 = vpop.f32.mrb[0].mxu0
        %v1015 = vadd.f32 0.0, %v1014
        %v1016 = vpop.f32.mrb[0].mxu0
        %1017 = vmatprep.mubr.f32.mxu0 0.0
        %1018 = vmatmul.mubr.f32.gmra.mrb[0].mxu0 %v518
        %v1019 = vpop.f32.mrb[0].mxu0
        %v1020 = vadd.f32 0.0, %v1019
        %v1021 = vpop.f32.mrb[0].mxu0
        %1022 = vmatprep.mubr.f32.mxu0 0.0
        %1023 = vmatmul.mubr.f32.gmra.mrb[0].mxu0 %v520
        %v1024 = vpop.f32.mrb[0].mxu0
        %v1025 = vadd.f32 0.0, %v1024
        %v1026 = vpop.f32.mrb[0].mxu0
        %1027 = vmatprep.mubr.f32.mxu0 0.0
        %1028 = vmatmul.mubr.f32.gmra.mrb[0].mxu0 %v522
        %v1029 = vpop.f32.mrb[0].mxu0
        %v1030 = vadd.f32 0.0, %v1029
        %v1031 = vpop.f32.mrb[0].mxu0
        %1032 = vmatprep.mubr.f32.mxu0 0.0
        %1033 = vmatmul.mubr.f32.gmra.mrb[0].mxu0 %v524
        %v1034 = vpop.f32.mrb[0].mxu0
        %v1035 = vadd.f32 0.0, %v1034
        %v1036 = vpop.f32.mrb[0].mxu0
        %1037 = vmatprep.mubr.f32.mxu0 0.0
        %1038 = vmatmul.mubr.f32.gmra.mrb[0].mxu0 %v526
        %v1039 = vpop.f32.mrb[0].mxu0
        %v1040 = vadd.f32 0.0, %v1039
        %v1041 = vpop.f32.mrb[0].mxu0
        %1042 = vmatprep.mubr.f32.mxu0 0.0
        %1043 = vmatmul.mubr.f32.gmra.mrb[0].mxu0 %v528
        %v1044 = vpop.f32.mrb[0].mxu0
        %v1045 = vadd.f32 0.0, %v1044
        %v1046 = vpop.f32.mrb[0].mxu0
        %1047 = vmatprep.mubr.f32.mxu0 0.0
        %1048 = vmatmul.mubr.f32.gmra.mrb[0].mxu0 %v530
        %v1049 = vpop.f32.mrb[0].mxu0
        %v1050 = vadd.f32 0.0, %v1049
        %v1051 = vpop.f32.mrb[0].mxu0
        %1052 = vmatprep.mubr.f32.mxu0 0.0
        %1053 = vmatmul.mubr.f32.gmra.mrb[0].mxu0 %v532
        %v1054 = vpop.f32.mrb[0].mxu0
        %v1055 = vadd.f32 0.0, %v1054
        %v1056 = vpop.f32.mrb[0].mxu0
        %1057 = vmatprep.mubr.f32.mxu0 0.0
        %1058 = vmatmul.mubr.f32.gmra.mrb[0].mxu0 %v534
        %v1059 = vpop.f32.mrb[0].mxu0
        %v1060 = vadd.f32 0.0, %v1059
        %v1061 = vpop.f32.mrb[0].mxu0
        %1062 = vmatprep.mubr.f32.mxu0 0.0
        %1063 = vmatmul.mubr.f32.gmra.mrb[0].mxu0 %v536
        %v1064 = vpop.f32.mrb[0].mxu0
        %v1065 = vadd.f32 0.0, %v1064
        %v1066 = vpop.f32.mrb[0].mxu0
        %1067 = vmatprep.mubr.f32.mxu0 0.0
        %1068 = vmatmul.mubr.f32.gmra.mrb[0].mxu0 %v538
        %v1069 = vpop.f32.mrb[0].mxu0
        %v1070 = vadd.f32 0.0, %v1069
        %v1071 = vpop.f32.mrb[0].mxu0
        %1072 = vmatprep.mubr.f32.mxu0 0.0
        %1073 = vmatmul.mubr.f32.gmra.mrb[0].mxu0 %v930
        %v1074 = vpop.f32.mrb[0].mxu0
        %v1075 = vadd.f32 0.0, %v1074
        %v1076 = vpop.f32.mrb[0].mxu0
        %1077 = vmatprep.mubr.f32.mxu0 0.0
        %1078 = vmatmul.mubr.f32.gmra.mrb[0].mxu0 %v933
        %v1079 = vpop.f32.mrb[0].mxu0
        %v1080 = vadd.f32 0.0, %v1079
        %v1081 = vpop.f32.mrb[0].mxu0
        %1082 = vdwg.mxu0
        %v1083 = vadd.f32 %v911, %v1005
        %v1084 = vadd.f32 %v912, %v1010
        %v1085 = vadd.f32 %v913, %v1015
        %v1086 = vadd.f32 %v914, %v1020
        %v1087 = vadd.f32 %v915, %v1025
        %v1088 = vadd.f32 %v916, %v1030
        %v1089 = vadd.f32 %v917, %v1035
        %v1090 = vadd.f32 %v918, %v1040
        %v1091 = vadd.f32 %v919, %v1045
        %v1092 = vadd.f32 %v920, %v1050
        %v1093 = vadd.f32 %v921, %v1055
        %v1094 = vadd.f32 %v922, %v1060
        %v1095 = vadd.f32 %v923, %v1065
        %v1096 = vadd.f32 %v924, %v1070
        %v1097 = vadd.f32 %v925, %v1075
        %v1098 = vadd.f32 %v926, %v1080
        %v1100 = vrot.slane %v252, 1
        %v1101 = vrot.slane %v253, 1
        %v1102 = vsel %vm283, %v1100, %v1101
        %v1103 = vrot.slane %v254, 1
        %v1104 = vsel %vm283, %v1101, %v1103
        %s1105 = scalar_lea.vmem %s1, 16
        %v1106 = vld [vmem:[%s1105] sm:$0xf]
        %v1107 = vsel %vm326, %v1102, 0
        %v1109 = vsel %vm326, %v1104, 0
        %v1112 = vsel %vm359, %v1106, 0
        %1114 = vmatprep.subr.mxu0 0.0
        %1115 = vmatpush1.msra.mxu0 %v1112
        %1116 = vmatprep.subr.mxu0 0.0
        %1117 = vmatpush1.msra.mxu0 0.0
        %1118 = vmatprep.subr.mxu0 0.0
        %1119 = vmatpush1.msra.mxu0 0.0
        %1120 = vmatprep.subr.mxu0 0.0
        %1121 = vmatpush1.msra.mxu0 0.0
        %1122 = vmatprep.subr.mxu0 0.0
        %1123 = vmatpush1.msra.mxu0 0.0
        %1124 = vmatprep.subr.mxu0 0.0
        %1125 = vmatpush1.msra.mxu0 0.0
        %1126 = vmatprep.subr.mxu0 0.0
        %1127 = vmatpush1.msra.mxu0 0.0
        %1128 = vmatprep.subr.mxu0 0.0
        %1129 = vmatpush1.msra.mxu0 0.0
        %1130 = vmatprep.subr.mxu0 0.0
        %1131 = vmatpush1.msra.mxu0 0.0
        %1132 = vmatprep.subr.mxu0 0.0
        %1133 = vmatpush1.msra.mxu0 0.0
        %1134 = vmatprep.subr.mxu0 0.0
        %1135 = vmatpush1.msra.mxu0 0.0
        %1136 = vmatprep.subr.mxu0 0.0
        %1137 = vmatpush1.msra.mxu0 0.0
        %1138 = vmatprep.subr.mxu0 0.0
        %1139 = vmatpush1.msra.mxu0 0.0
        %1140 = vmatprep.subr.mxu0 0.0
        %1141 = vmatpush1.msra.mxu0 0.0
        %1142 = vmatprep.subr.mxu0 0.0
        %1143 = vmatpush1.msra.mxu0 0.0
        %1144 = vmatprep.subr.mxu0 0.0
        %1145 = vmatpush1.msra.mxu0 0.0
        %1146 = vmatprep.subr.mxu0 0.0
        %1147 = vmatpush1.msra.mxu0 0.0
        %1148 = vmatprep.subr.mxu0 0.0
        %1149 = vmatpush1.msra.mxu0 0.0
        %1150 = vmatprep.subr.mxu0 0.0
        %1151 = vmatpush1.msra.mxu0 0.0
        %1152 = vmatprep.subr.mxu0 0.0
        %1153 = vmatpush1.msra.mxu0 0.0
        %1154 = vmatprep.subr.mxu0 0.0
        %1155 = vmatpush1.msra.mxu0 0.0
        %1156 = vmatprep.subr.mxu0 0.0
        %1157 = vmatpush1.msra.mxu0 0.0
        %1158 = vmatprep.subr.mxu0 0.0
        %1159 = vmatpush1.msra.mxu0 0.0
        %1160 = vmatprep.subr.mxu0 0.0
        %1161 = vmatpush1.msra.mxu0 0.0
        %1162 = vmatprep.subr.mxu0 0.0
        %1163 = vmatpush1.msra.mxu0 0.0
        %1164 = vmatprep.subr.mxu0 0.0
        %1165 = vmatpush1.msra.mxu0 0.0
        %1166 = vmatprep.subr.mxu0 0.0
        %1167 = vmatpush1.msra.mxu0 0.0
        %1168 = vmatprep.subr.mxu0 0.0
        %1169 = vmatpush1.msra.mxu0 0.0
        %1170 = vmatprep.subr.mxu0 0.0
        %1171 = vmatpush1.msra.mxu0 0.0
        %1172 = vmatprep.subr.mxu0 0.0
        %1173 = vmatpush1.msra.mxu0 0.0
        %1174 = vmatprep.subr.mxu0 0.0
        %1175 = vmatpush1.msra.mxu0 0.0
        %1176 = vmatprep.subr.mxu0 0.0
        %1177 = vmatpush1.msra.mxu0 0.0
        %1178 = vmatprep.mubr.f32.mxu0 0.0
        %1179 = vmatmul.mubr.f32.gmra.mrb[0].mxu0 %v331
        %v1180 = vpop.f32.mrb[0].mxu0
        %v1181 = vadd.f32 0.0, %v1180
        %v1182 = vpop.f32.mrb[0].mxu0
        %1183 = vmatprep.mubr.f32.mxu0 0.0
        %1184 = vmatmul.mubr.f32.gmra.mrb[0].mxu0 %v333
        %v1185 = vpop.f32.mrb[0].mxu0
        %v1186 = vadd.f32 0.0, %v1185
        %v1187 = vpop.f32.mrb[0].mxu0
        %1188 = vmatprep.mubr.f32.mxu0 0.0
        %1189 = vmatmul.mubr.f32.gmra.mrb[0].mxu0 %v335
        %v1190 = vpop.f32.mrb[0].mxu0
        %v1191 = vadd.f32 0.0, %v1190
        %v1192 = vpop.f32.mrb[0].mxu0
        %1193 = vmatprep.mubr.f32.mxu0 0.0
        %1194 = vmatmul.mubr.f32.gmra.mrb[0].mxu0 %v337
        %v1195 = vpop.f32.mrb[0].mxu0
        %v1196 = vadd.f32 0.0, %v1195
        %v1197 = vpop.f32.mrb[0].mxu0
        %1198 = vmatprep.mubr.f32.mxu0 0.0
        %1199 = vmatmul.mubr.f32.gmra.mrb[0].mxu0 %v339
        %v1200 = vpop.f32.mrb[0].mxu0
        %v1201 = vadd.f32 0.0, %v1200
        %v1202 = vpop.f32.mrb[0].mxu0
        %1203 = vmatprep.mubr.f32.mxu0 0.0
        %1204 = vmatmul.mubr.f32.gmra.mrb[0].mxu0 %v341
        %v1205 = vpop.f32.mrb[0].mxu0
        %v1206 = vadd.f32 0.0, %v1205
        %v1207 = vpop.f32.mrb[0].mxu0
        %1208 = vmatprep.mubr.f32.mxu0 0.0
        %1209 = vmatmul.mubr.f32.gmra.mrb[0].mxu0 %v343
        %v1210 = vpop.f32.mrb[0].mxu0
        %v1211 = vadd.f32 0.0, %v1210
        %v1212 = vpop.f32.mrb[0].mxu0
        %1213 = vmatprep.mubr.f32.mxu0 0.0
        %1214 = vmatmul.mubr.f32.gmra.mrb[0].mxu0 %v345
        %v1215 = vpop.f32.mrb[0].mxu0
        %v1216 = vadd.f32 0.0, %v1215
        %v1217 = vpop.f32.mrb[0].mxu0
        %1218 = vmatprep.mubr.f32.mxu0 0.0
        %1219 = vmatmul.mubr.f32.gmra.mrb[0].mxu0 %v347
        %v1220 = vpop.f32.mrb[0].mxu0
        %v1221 = vadd.f32 0.0, %v1220
        %v1222 = vpop.f32.mrb[0].mxu0
        %1223 = vmatprep.mubr.f32.mxu0 0.0
        %1224 = vmatmul.mubr.f32.gmra.mrb[0].mxu0 %v349
        %v1225 = vpop.f32.mrb[0].mxu0
        %v1226 = vadd.f32 0.0, %v1225
        %v1227 = vpop.f32.mrb[0].mxu0
        %1228 = vmatprep.mubr.f32.mxu0 0.0
        %1229 = vmatmul.mubr.f32.gmra.mrb[0].mxu0 %v351
        %v1230 = vpop.f32.mrb[0].mxu0
        %v1231 = vadd.f32 0.0, %v1230
        %v1232 = vpop.f32.mrb[0].mxu0
        %1233 = vmatprep.mubr.f32.mxu0 0.0
        %1234 = vmatmul.mubr.f32.gmra.mrb[0].mxu0 %v353
        %v1235 = vpop.f32.mrb[0].mxu0
        %v1236 = vadd.f32 0.0, %v1235
        %v1237 = vpop.f32.mrb[0].mxu0
        %1238 = vmatprep.mubr.f32.mxu0 0.0
        %1239 = vmatmul.mubr.f32.gmra.mrb[0].mxu0 %v355
        %v1240 = vpop.f32.mrb[0].mxu0
        %v1241 = vadd.f32 0.0, %v1240
        %v1242 = vpop.f32.mrb[0].mxu0
        %1243 = vmatprep.mubr.f32.mxu0 0.0
        %1244 = vmatmul.mubr.f32.gmra.mrb[0].mxu0 %v357
        %v1245 = vpop.f32.mrb[0].mxu0
        %v1246 = vadd.f32 0.0, %v1245
        %v1247 = vpop.f32.mrb[0].mxu0
        %1248 = vmatprep.mubr.f32.mxu0 0.0
        %1249 = vmatmul.mubr.f32.gmra.mrb[0].mxu0 %v1107
        %v1250 = vpop.f32.mrb[0].mxu0
        %v1251 = vadd.f32 0.0, %v1250
        %v1252 = vpop.f32.mrb[0].mxu0
        %1253 = vmatprep.mubr.f32.mxu0 0.0
        %1254 = vmatmul.mubr.f32.gmra.mrb[0].mxu0 %v1109
        %v1255 = vpop.f32.mrb[0].mxu0
        %v1256 = vadd.f32 0.0, %v1255
        %v1257 = vpop.f32.mrb[0].mxu0
        %1258 = vdwg.mxu0
        %v1259 = vadd.f32 %v1083, %v1181
        %v1260 = vadd.f32 %v1084, %v1186
        %v1261 = vadd.f32 %v1085, %v1191
        %v1262 = vadd.f32 %v1086, %v1196
        %v1263 = vadd.f32 %v1087, %v1201
        %v1264 = vadd.f32 %v1088, %v1206
        %v1265 = vadd.f32 %v1089, %v1211
        %v1266 = vadd.f32 %v1090, %v1216
        %v1267 = vadd.f32 %v1091, %v1221
        %v1268 = vadd.f32 %v1092, %v1226
        %v1269 = vadd.f32 %v1093, %v1231
        %v1270 = vadd.f32 %v1094, %v1236
        %v1271 = vadd.f32 %v1095, %v1241
        %v1272 = vadd.f32 %v1096, %v1246
        %v1273 = vadd.f32 %v1097, %v1251
        %v1274 = vadd.f32 %v1098, %v1256
        %v1275 = vrot.slane %v252, 2
        %v1276 = vrot.slane %v253, 2
        %v1277 = vsel %vm688, %v1275, %v1276
        %v1278 = vrot.slane %v254, 2
        %v1279 = vsel %vm688, %v1276, %v1278
        %s1280 = scalar_lea.vmem %s1, 20
        %v1281 = vld [vmem:[%s1280] sm:$0xf]
        %v1282 = vsel %vm326, %v1277, 0
        %v1284 = vsel %vm326, %v1279, 0
        %v1287 = vsel %vm359, %v1281, 0
        %1289 = vmatprep.subr.mxu0 0.0
        %1290 = vmatpush1.msra.mxu0 %v1287
        %1291 = vmatprep.subr.mxu0 0.0
        %1292 = vmatpush1.msra.mxu0 0.0
        %1293 = vmatprep.subr.mxu0 0.0
        %1294 = vmatpush1.msra.mxu0 0.0
        %1295 = vmatprep.subr.mxu0 0.0
        %1296 = vmatpush1.msra.mxu0 0.0
        %1297 = vmatprep.subr.mxu0 0.0
        %1298 = vmatpush1.msra.mxu0 0.0
        %1299 = vmatprep.subr.mxu0 0.0
        %1300 = vmatpush1.msra.mxu0 0.0
        %1301 = vmatprep.subr.mxu0 0.0
        %1302 = vmatpush1.msra.mxu0 0.0
        %1303 = vmatprep.subr.mxu0 0.0
        %1304 = vmatpush1.msra.mxu0 0.0
        %1305 = vmatprep.subr.mxu0 0.0
        %1306 = vmatpush1.msra.mxu0 0.0
        %1307 = vmatprep.subr.mxu0 0.0
        %1308 = vmatpush1.msra.mxu0 0.0
        %1309 = vmatprep.subr.mxu0 0.0
        %1310 = vmatpush1.msra.mxu0 0.0
        %1311 = vmatprep.subr.mxu0 0.0
        %1312 = vmatpush1.msra.mxu0 0.0
        %1313 = vmatprep.subr.mxu0 0.0
        %1314 = vmatpush1.msra.mxu0 0.0
        %1315 = vmatprep.subr.mxu0 0.0
        %1316 = vmatpush1.msra.mxu0 0.0
        %1317 = vmatprep.subr.mxu0 0.0
        %1318 = vmatpush1.msra.mxu0 0.0
        %1319 = vmatprep.subr.mxu0 0.0
        %1320 = vmatpush1.msra.mxu0 0.0
        %1321 = vmatprep.subr.mxu0 0.0
        %1322 = vmatpush1.msra.mxu0 0.0
        %1323 = vmatprep.subr.mxu0 0.0
        %1324 = vmatpush1.msra.mxu0 0.0
        %1325 = vmatprep.subr.mxu0 0.0
        %1326 = vmatpush1.msra.mxu0 0.0
        %1327 = vmatprep.subr.mxu0 0.0
        %1328 = vmatpush1.msra.mxu0 0.0
        %1329 = vmatprep.subr.mxu0 0.0
        %1330 = vmatpush1.msra.mxu0 0.0
        %1331 = vmatprep.subr.mxu0 0.0
        %1332 = vmatpush1.msra.mxu0 0.0
        %1333 = vmatprep.subr.mxu0 0.0
        %1334 = vmatpush1.msra.mxu0 0.0
        %1335 = vmatprep.subr.mxu0 0.0
        %1336 = vmatpush1.msra.mxu0 0.0
        %1337 = vmatprep.subr.mxu0 0.0
        %1338 = vmatpush1.msra.mxu0 0.0
        %1339 = vmatprep.subr.mxu0 0.0
        %1340 = vmatpush1.msra.mxu0 0.0
        %1341 = vmatprep.subr.mxu0 0.0
        %1342 = vmatpush1.msra.mxu0 0.0
        %1343 = vmatprep.subr.mxu0 0.0
        %1344 = vmatpush1.msra.mxu0 0.0
        %1345 = vmatprep.subr.mxu0 0.0
        %1346 = vmatpush1.msra.mxu0 0.0
        %1347 = vmatprep.subr.mxu0 0.0
        %1348 = vmatpush1.msra.mxu0 0.0
        %1349 = vmatprep.subr.mxu0 0.0
        %1350 = vmatpush1.msra.mxu0 0.0
        %1351 = vmatprep.subr.mxu0 0.0
        %1352 = vmatpush1.msra.mxu0 0.0
        %1353 = vmatprep.mubr.f32.mxu0 0.0
        %1354 = vmatmul.mubr.f32.gmra.mrb[0].mxu0 %v735
        %v1355 = vpop.f32.mrb[0].mxu0
        %v1356 = vadd.f32 0.0, %v1355
        %v1357 = vpop.f32.mrb[0].mxu0
        %1358 = vmatprep.mubr.f32.mxu0 0.0
        %1359 = vmatmul.mubr.f32.gmra.mrb[0].mxu0 %v737
        %v1360 = vpop.f32.mrb[0].mxu0
        %v1361 = vadd.f32 0.0, %v1360
        %v1362 = vpop.f32.mrb[0].mxu0
        %1363 = vmatprep.mubr.f32.mxu0 0.0
        %1364 = vmatmul.mubr.f32.gmra.mrb[0].mxu0 %v739
        %v1365 = vpop.f32.mrb[0].mxu0
        %v1366 = vadd.f32 0.0, %v1365
        %v1367 = vpop.f32.mrb[0].mxu0
        %1368 = vmatprep.mubr.f32.mxu0 0.0
        %1369 = vmatmul.mubr.f32.gmra.mrb[0].mxu0 %v741
        %v1370 = vpop.f32.mrb[0].mxu0
        %v1371 = vadd.f32 0.0, %v1370
        %v1372 = vpop.f32.mrb[0].mxu0
        %1373 = vmatprep.mubr.f32.mxu0 0.0
        %1374 = vmatmul.mubr.f32.gmra.mrb[0].mxu0 %v743
        %v1375 = vpop.f32.mrb[0].mxu0
        %v1376 = vadd.f32 0.0, %v1375
        %v1377 = vpop.f32.mrb[0].mxu0
        %1378 = vmatprep.mubr.f32.mxu0 0.0
        %1379 = vmatmul.mubr.f32.gmra.mrb[0].mxu0 %v745
        %v1380 = vpop.f32.mrb[0].mxu0
        %v1381 = vadd.f32 0.0, %v1380
        %v1382 = vpop.f32.mrb[0].mxu0
        %1383 = vmatprep.mubr.f32.mxu0 0.0
        %1384 = vmatmul.mubr.f32.gmra.mrb[0].mxu0 %v747
        %v1385 = vpop.f32.mrb[0].mxu0
        %v1386 = vadd.f32 0.0, %v1385
        %v1387 = vpop.f32.mrb[0].mxu0
        %1388 = vmatprep.mubr.f32.mxu0 0.0
        %1389 = vmatmul.mubr.f32.gmra.mrb[0].mxu0 %v749
        %v1390 = vpop.f32.mrb[0].mxu0
        %v1391 = vadd.f32 0.0, %v1390
        %v1392 = vpop.f32.mrb[0].mxu0
        %1393 = vmatprep.mubr.f32.mxu0 0.0
        %1394 = vmatmul.mubr.f32.gmra.mrb[0].mxu0 %v751
        %v1395 = vpop.f32.mrb[0].mxu0
        %v1396 = vadd.f32 0.0, %v1395
        %v1397 = vpop.f32.mrb[0].mxu0
        %1398 = vmatprep.mubr.f32.mxu0 0.0
        %1399 = vmatmul.mubr.f32.gmra.mrb[0].mxu0 %v753
        %v1400 = vpop.f32.mrb[0].mxu0
        %v1401 = vadd.f32 0.0, %v1400
        %v1402 = vpop.f32.mrb[0].mxu0
        %1403 = vmatprep.mubr.f32.mxu0 0.0
        %1404 = vmatmul.mubr.f32.gmra.mrb[0].mxu0 %v755
        %v1405 = vpop.f32.mrb[0].mxu0
        %v1406 = vadd.f32 0.0, %v1405
        %v1407 = vpop.f32.mrb[0].mxu0
        %1408 = vmatprep.mubr.f32.mxu0 0.0
        %1409 = vmatmul.mubr.f32.gmra.mrb[0].mxu0 %v757
        %v1410 = vpop.f32.mrb[0].mxu0
        %v1411 = vadd.f32 0.0, %v1410
        %v1412 = vpop.f32.mrb[0].mxu0
        %1413 = vmatprep.mubr.f32.mxu0 0.0
        %1414 = vmatmul.mubr.f32.gmra.mrb[0].mxu0 %v759
        %v1415 = vpop.f32.mrb[0].mxu0
        %v1416 = vadd.f32 0.0, %v1415
        %v1417 = vpop.f32.mrb[0].mxu0
        %1418 = vmatprep.mubr.f32.mxu0 0.0
        %1419 = vmatmul.mubr.f32.gmra.mrb[0].mxu0 %v761
        %v1420 = vpop.f32.mrb[0].mxu0
        %v1421 = vadd.f32 0.0, %v1420
        %v1422 = vpop.f32.mrb[0].mxu0
        %1423 = vmatprep.mubr.f32.mxu0 0.0
        %1424 = vmatmul.mubr.f32.gmra.mrb[0].mxu0 %v1282
        %v1425 = vpop.f32.mrb[0].mxu0
        %v1426 = vadd.f32 0.0, %v1425
        %v1427 = vpop.f32.mrb[0].mxu0
        %1428 = vmatprep.mubr.f32.mxu0 0.0
        %1429 = vmatmul.mubr.f32.gmra.mrb[0].mxu0 %v1284
        %v1430 = vpop.f32.mrb[0].mxu0
        %v1431 = vadd.f32 0.0, %v1430
        %v1432 = vpop.f32.mrb[0].mxu0
        %1433 = vdwg.mxu0
        %v1434 = vadd.f32 %v1259, %v1356
        %v1435 = vadd.f32 %v1260, %v1361
        %v1436 = vadd.f32 %v1261, %v1366
        %v1437 = vadd.f32 %v1262, %v1371
        %v1438 = vadd.f32 %v1263, %v1376
        %v1439 = vadd.f32 %v1264, %v1381
        %v1440 = vadd.f32 %v1265, %v1386
        %v1441 = vadd.f32 %v1266, %v1391
        %v1442 = vadd.f32 %v1267, %v1396
        %v1443 = vadd.f32 %v1268, %v1401
        %v1444 = vadd.f32 %v1269, %v1406
        %v1445 = vadd.f32 %v1270, %v1411
        %v1446 = vadd.f32 %v1271, %v1416
        %v1447 = vadd.f32 %v1272, %v1421
        %v1448 = vadd.f32 %v1273, %v1426
        %v1449 = vadd.f32 %v1274, %v1431
        %s1450 = scalar_lea.vmem %s1, 24
        %v1451 = vld [vmem:[%s1450] sm:$0xf]
        %v1453 = vsel %vm326, %v255, 0
        %v1456 = vsel %vm326, %v256, 0
        %v1459 = vsel %vm359, %v1451, 0
        %1461 = vmatprep.subr.mxu0 0.0
        %1462 = vmatpush1.msra.mxu0 %v1459
        %1463 = vmatprep.subr.mxu0 0.0
        %1464 = vmatpush1.msra.mxu0 0.0
        %1465 = vmatprep.subr.mxu0 0.0
        %1466 = vmatpush1.msra.mxu0 0.0
        %1467 = vmatprep.subr.mxu0 0.0
        %1468 = vmatpush1.msra.mxu0 0.0
        %1469 = vmatprep.subr.mxu0 0.0
        %1470 = vmatpush1.msra.mxu0 0.0
        %1471 = vmatprep.subr.mxu0 0.0
        %1472 = vmatpush1.msra.mxu0 0.0
        %1473 = vmatprep.subr.mxu0 0.0
        %1474 = vmatpush1.msra.mxu0 0.0
        %1475 = vmatprep.subr.mxu0 0.0
        %1476 = vmatpush1.msra.mxu0 0.0
        %1477 = vmatprep.subr.mxu0 0.0
        %1478 = vmatpush1.msra.mxu0 0.0
        %1479 = vmatprep.subr.mxu0 0.0
        %1480 = vmatpush1.msra.mxu0 0.0
        %1481 = vmatprep.subr.mxu0 0.0
        %1482 = vmatpush1.msra.mxu0 0.0
        %1483 = vmatprep.subr.mxu0 0.0
        %1484 = vmatpush1.msra.mxu0 0.0
        %1485 = vmatprep.subr.mxu0 0.0
        %1486 = vmatpush1.msra.mxu0 0.0
        %1487 = vmatprep.subr.mxu0 0.0
        %1488 = vmatpush1.msra.mxu0 0.0
        %1489 = vmatprep.subr.mxu0 0.0
        %1490 = vmatpush1.msra.mxu0 0.0
        %1491 = vmatprep.subr.mxu0 0.0
        %1492 = vmatpush1.msra.mxu0 0.0
        %1493 = vmatprep.subr.mxu0 0.0
        %1494 = vmatpush1.msra.mxu0 0.0
        %1495 = vmatprep.subr.mxu0 0.0
        %1496 = vmatpush1.msra.mxu0 0.0
        %1497 = vmatprep.subr.mxu0 0.0
        %1498 = vmatpush1.msra.mxu0 0.0
        %1499 = vmatprep.subr.mxu0 0.0
        %1500 = vmatpush1.msra.mxu0 0.0
        %1501 = vmatprep.subr.mxu0 0.0
        %1502 = vmatpush1.msra.mxu0 0.0
        %1503 = vmatprep.subr.mxu0 0.0
        %1504 = vmatpush1.msra.mxu0 0.0
        %1505 = vmatprep.subr.mxu0 0.0
        %1506 = vmatpush1.msra.mxu0 0.0
        %1507 = vmatprep.subr.mxu0 0.0
        %1508 = vmatpush1.msra.mxu0 0.0
        %1509 = vmatprep.subr.mxu0 0.0
        %1510 = vmatpush1.msra.mxu0 0.0
        %1511 = vmatprep.subr.mxu0 0.0
        %1512 = vmatpush1.msra.mxu0 0.0
        %1513 = vmatprep.subr.mxu0 0.0
        %1514 = vmatpush1.msra.mxu0 0.0
        %1515 = vmatprep.subr.mxu0 0.0
        %1516 = vmatpush1.msra.mxu0 0.0
        %1517 = vmatprep.subr.mxu0 0.0
        %1518 = vmatpush1.msra.mxu0 0.0
        %1519 = vmatprep.subr.mxu0 0.0
        %1520 = vmatpush1.msra.mxu0 0.0
        %1521 = vmatprep.subr.mxu0 0.0
        %1522 = vmatpush1.msra.mxu0 0.0
        %1523 = vmatprep.subr.mxu0 0.0
        %1524 = vmatpush1.msra.mxu0 0.0
        %1525 = vmatprep.mubr.f32.mxu0 0.0
        %1526 = vmatmul.mubr.f32.gmra.mrb[0].mxu0 %v516
        %v1527 = vpop.f32.mrb[0].mxu0
        %v1528 = vadd.f32 0.0, %v1527
        %v1529 = vpop.f32.mrb[0].mxu0
        %1530 = vmatprep.mubr.f32.mxu0 0.0
        %1531 = vmatmul.mubr.f32.gmra.mrb[0].mxu0 %v518
        %v1532 = vpop.f32.mrb[0].mxu0
        %v1533 = vadd.f32 0.0, %v1532
        %v1534 = vpop.f32.mrb[0].mxu0
        %1535 = vmatprep.mubr.f32.mxu0 0.0
        %1536 = vmatmul.mubr.f32.gmra.mrb[0].mxu0 %v520
        %v1537 = vpop.f32.mrb[0].mxu0
        %v1538 = vadd.f32 0.0, %v1537
        %v1539 = vpop.f32.mrb[0].mxu0
        %1540 = vmatprep.mubr.f32.mxu0 0.0
        %1541 = vmatmul.mubr.f32.gmra.mrb[0].mxu0 %v522
        %v1542 = vpop.f32.mrb[0].mxu0
        %v1543 = vadd.f32 0.0, %v1542
        %v1544 = vpop.f32.mrb[0].mxu0
        %1545 = vmatprep.mubr.f32.mxu0 0.0
        %1546 = vmatmul.mubr.f32.gmra.mrb[0].mxu0 %v524
        %v1547 = vpop.f32.mrb[0].mxu0
        %v1548 = vadd.f32 0.0, %v1547
        %v1549 = vpop.f32.mrb[0].mxu0
        %1550 = vmatprep.mubr.f32.mxu0 0.0
        %1551 = vmatmul.mubr.f32.gmra.mrb[0].mxu0 %v526
        %v1552 = vpop.f32.mrb[0].mxu0
        %v1553 = vadd.f32 0.0, %v1552
        %v1554 = vpop.f32.mrb[0].mxu0
        %1555 = vmatprep.mubr.f32.mxu0 0.0
        %1556 = vmatmul.mubr.f32.gmra.mrb[0].mxu0 %v528
        %v1557 = vpop.f32.mrb[0].mxu0
        %v1558 = vadd.f32 0.0, %v1557
        %v1559 = vpop.f32.mrb[0].mxu0
        %1560 = vmatprep.mubr.f32.mxu0 0.0
        %1561 = vmatmul.mubr.f32.gmra.mrb[0].mxu0 %v530
        %v1562 = vpop.f32.mrb[0].mxu0
        %v1563 = vadd.f32 0.0, %v1562
        %v1564 = vpop.f32.mrb[0].mxu0
        %1565 = vmatprep.mubr.f32.mxu0 0.0
        %1566 = vmatmul.mubr.f32.gmra.mrb[0].mxu0 %v532
        %v1567 = vpop.f32.mrb[0].mxu0
        %v1568 = vadd.f32 0.0, %v1567
        %v1569 = vpop.f32.mrb[0].mxu0
        %1570 = vmatprep.mubr.f32.mxu0 0.0
        %1571 = vmatmul.mubr.f32.gmra.mrb[0].mxu0 %v534
        %v1572 = vpop.f32.mrb[0].mxu0
        %v1573 = vadd.f32 0.0, %v1572
        %v1574 = vpop.f32.mrb[0].mxu0
        %1575 = vmatprep.mubr.f32.mxu0 0.0
        %1576 = vmatmul.mubr.f32.gmra.mrb[0].mxu0 %v536
        %v1577 = vpop.f32.mrb[0].mxu0
        %v1578 = vadd.f32 0.0, %v1577
        %v1579 = vpop.f32.mrb[0].mxu0
        %1580 = vmatprep.mubr.f32.mxu0 0.0
        %1581 = vmatmul.mubr.f32.gmra.mrb[0].mxu0 %v538
        %v1582 = vpop.f32.mrb[0].mxu0
        %v1583 = vadd.f32 0.0, %v1582
        %v1584 = vpop.f32.mrb[0].mxu0
        %1585 = vmatprep.mubr.f32.mxu0 0.0
        %1586 = vmatmul.mubr.f32.gmra.mrb[0].mxu0 %v930
        %v1587 = vpop.f32.mrb[0].mxu0
        %v1588 = vadd.f32 0.0, %v1587
        %v1589 = vpop.f32.mrb[0].mxu0
        %1590 = vmatprep.mubr.f32.mxu0 0.0
        %1591 = vmatmul.mubr.f32.gmra.mrb[0].mxu0 %v933
        %v1592 = vpop.f32.mrb[0].mxu0
        %v1593 = vadd.f32 0.0, %v1592
        %v1594 = vpop.f32.mrb[0].mxu0
        %1595 = vmatprep.mubr.f32.mxu0 0.0
        %1596 = vmatmul.mubr.f32.gmra.mrb[0].mxu0 %v1453
        %v1597 = vpop.f32.mrb[0].mxu0
        %v1598 = vadd.f32 0.0, %v1597
        %v1599 = vpop.f32.mrb[0].mxu0
        %1600 = vmatprep.mubr.f32.mxu0 0.0
        %1601 = vmatmul.mubr.f32.gmra.mrb[0].mxu0 %v1456
        %v1602 = vpop.f32.mrb[0].mxu0
        %v1603 = vadd.f32 0.0, %v1602
        %v1604 = vpop.f32.mrb[0].mxu0
        %1605 = vdwg.mxu0
        %v1606 = vadd.f32 %v1434, %v1528
        %v1607 = vadd.f32 %v1435, %v1533
        %v1608 = vadd.f32 %v1436, %v1538
        %v1609 = vadd.f32 %v1437, %v1543
        %v1610 = vadd.f32 %v1438, %v1548
        %v1611 = vadd.f32 %v1439, %v1553
        %v1612 = vadd.f32 %v1440, %v1558
        %v1613 = vadd.f32 %v1441, %v1563
        %v1614 = vadd.f32 %v1442, %v1568
        %v1615 = vadd.f32 %v1443, %v1573
        %v1616 = vadd.f32 %v1444, %v1578
        %v1617 = vadd.f32 %v1445, %v1583
        %v1618 = vadd.f32 %v1446, %v1588
        %v1619 = vadd.f32 %v1447, %v1593
        %v1620 = vadd.f32 %v1448, %v1598
        %v1621 = vadd.f32 %v1449, %v1603
        %v1623 = vrot.slane %v255, 1
        %v1624 = vrot.slane %v256, 1
        %v1625 = vsel %vm283, %v1623, %v1624
        %v1626 = vrot.slane %v257, 1
        %v1627 = vsel %vm283, %v1624, %v1626
        %s1628 = scalar_lea.vmem %s1, 28
        %v1629 = vld [vmem:[%s1628] sm:$0xf]
        %v1630 = vsel %vm326, %v1625, 0
        %v1632 = vsel %vm326, %v1627, 0
        %v1635 = vsel %vm359, %v1629, 0
        %1637 = vmatprep.subr.mxu0 0.0
        %1638 = vmatpush1.msra.mxu0 %v1635
        %1639 = vmatprep.subr.mxu0 0.0
        %1640 = vmatpush1.msra.mxu0 0.0
        %1641 = vmatprep.subr.mxu0 0.0
        %1642 = vmatpush1.msra.mxu0 0.0
        %1643 = vmatprep.subr.mxu0 0.0
        %1644 = vmatpush1.msra.mxu0 0.0
        %1645 = vmatprep.subr.mxu0 0.0
        %1646 = vmatpush1.msra.mxu0 0.0
        %1647 = vmatprep.subr.mxu0 0.0
        %1648 = vmatpush1.msra.mxu0 0.0
        %1649 = vmatprep.subr.mxu0 0.0
        %1650 = vmatpush1.msra.mxu0 0.0
        %1651 = vmatprep.subr.mxu0 0.0
        %1652 = vmatpush1.msra.mxu0 0.0
        %1653 = vmatprep.subr.mxu0 0.0
        %1654 = vmatpush1.msra.mxu0 0.0
        %1655 = vmatprep.subr.mxu0 0.0
        %1656 = vmatpush1.msra.mxu0 0.0
        %1657 = vmatprep.subr.mxu0 0.0
        %1658 = vmatpush1.msra.mxu0 0.0
        %1659 = vmatprep.subr.mxu0 0.0
        %1660 = vmatpush1.msra.mxu0 0.0
        %1661 = vmatprep.subr.mxu0 0.0
        %1662 = vmatpush1.msra.mxu0 0.0
        %1663 = vmatprep.subr.mxu0 0.0
        %1664 = vmatpush1.msra.mxu0 0.0
        %1665 = vmatprep.subr.mxu0 0.0
        %1666 = vmatpush1.msra.mxu0 0.0
        %1667 = vmatprep.subr.mxu0 0.0
        %1668 = vmatpush1.msra.mxu0 0.0
        %1669 = vmatprep.subr.mxu0 0.0
        %1670 = vmatpush1.msra.mxu0 0.0
        %1671 = vmatprep.subr.mxu0 0.0
        %1672 = vmatpush1.msra.mxu0 0.0
        %1673 = vmatprep.subr.mxu0 0.0
        %1674 = vmatpush1.msra.mxu0 0.0
        %1675 = vmatprep.subr.mxu0 0.0
        %1676 = vmatpush1.msra.mxu0 0.0
        %1677 = vmatprep.subr.mxu0 0.0
        %1678 = vmatpush1.msra.mxu0 0.0
        %1679 = vmatprep.subr.mxu0 0.0
        %1680 = vmatpush1.msra.mxu0 0.0
        %1681 = vmatprep.subr.mxu0 0.0
        %1682 = vmatpush1.msra.mxu0 0.0
        %1683 = vmatprep.subr.mxu0 0.0
        %1684 = vmatpush1.msra.mxu0 0.0
        %1685 = vmatprep.subr.mxu0 0.0
        %1686 = vmatpush1.msra.mxu0 0.0
        %1687 = vmatprep.subr.mxu0 0.0
        %1688 = vmatpush1.msra.mxu0 0.0
        %1689 = vmatprep.subr.mxu0 0.0
        %1690 = vmatpush1.msra.mxu0 0.0
        %1691 = vmatprep.subr.mxu0 0.0
        %1692 = vmatpush1.msra.mxu0 0.0
        %1693 = vmatprep.subr.mxu0 0.0
        %1694 = vmatpush1.msra.mxu0 0.0
        %1695 = vmatprep.subr.mxu0 0.0
        %1696 = vmatpush1.msra.mxu0 0.0
        %1697 = vmatprep.subr.mxu0 0.0
        %1698 = vmatpush1.msra.mxu0 0.0
        %1699 = vmatprep.subr.mxu0 0.0
        %1700 = vmatpush1.msra.mxu0 0.0
        %1701 = vmatprep.mubr.f32.mxu0 0.0
        %1702 = vmatmul.mubr.f32.gmra.mrb[0].mxu0 %v335
        %v1703 = vpop.f32.mrb[0].mxu0
        %v1704 = vadd.f32 0.0, %v1703
        %v1705 = vpop.f32.mrb[0].mxu0
        %1706 = vmatprep.mubr.f32.mxu0 0.0
        %1707 = vmatmul.mubr.f32.gmra.mrb[0].mxu0 %v337
        %v1708 = vpop.f32.mrb[0].mxu0
        %v1709 = vadd.f32 0.0, %v1708
        %v1710 = vpop.f32.mrb[0].mxu0
        %1711 = vmatprep.mubr.f32.mxu0 0.0
        %1712 = vmatmul.mubr.f32.gmra.mrb[0].mxu0 %v339
        %v1713 = vpop.f32.mrb[0].mxu0
        %v1714 = vadd.f32 0.0, %v1713
        %v1715 = vpop.f32.mrb[0].mxu0
        %1716 = vmatprep.mubr.f32.mxu0 0.0
        %1717 = vmatmul.mubr.f32.gmra.mrb[0].mxu0 %v341
        %v1718 = vpop.f32.mrb[0].mxu0
        %v1719 = vadd.f32 0.0, %v1718
        %v1720 = vpop.f32.mrb[0].mxu0
        %1721 = vmatprep.mubr.f32.mxu0 0.0
        %1722 = vmatmul.mubr.f32.gmra.mrb[0].mxu0 %v343
        %v1723 = vpop.f32.mrb[0].mxu0
        %v1724 = vadd.f32 0.0, %v1723
        %v1725 = vpop.f32.mrb[0].mxu0
        %1726 = vmatprep.mubr.f32.mxu0 0.0
        %1727 = vmatmul.mubr.f32.gmra.mrb[0].mxu0 %v345
        %v1728 = vpop.f32.mrb[0].mxu0
        %v1729 = vadd.f32 0.0, %v1728
        %v1730 = vpop.f32.mrb[0].mxu0
        %1731 = vmatprep.mubr.f32.mxu0 0.0
        %1732 = vmatmul.mubr.f32.gmra.mrb[0].mxu0 %v347
        %v1733 = vpop.f32.mrb[0].mxu0
        %v1734 = vadd.f32 0.0, %v1733
        %v1735 = vpop.f32.mrb[0].mxu0
        %1736 = vmatprep.mubr.f32.mxu0 0.0
        %1737 = vmatmul.mubr.f32.gmra.mrb[0].mxu0 %v349
        %v1738 = vpop.f32.mrb[0].mxu0
        %v1739 = vadd.f32 0.0, %v1738
        %v1740 = vpop.f32.mrb[0].mxu0
        %1741 = vmatprep.mubr.f32.mxu0 0.0
        %1742 = vmatmul.mubr.f32.gmra.mrb[0].mxu0 %v351
        %v1743 = vpop.f32.mrb[0].mxu0
        %v1744 = vadd.f32 0.0, %v1743
        %v1745 = vpop.f32.mrb[0].mxu0
        %1746 = vmatprep.mubr.f32.mxu0 0.0
        %1747 = vmatmul.mubr.f32.gmra.mrb[0].mxu0 %v353
        %v1748 = vpop.f32.mrb[0].mxu0
        %v1749 = vadd.f32 0.0, %v1748
        %v1750 = vpop.f32.mrb[0].mxu0
        %1751 = vmatprep.mubr.f32.mxu0 0.0
        %1752 = vmatmul.mubr.f32.gmra.mrb[0].mxu0 %v355
        %v1753 = vpop.f32.mrb[0].mxu0
        %v1754 = vadd.f32 0.0, %v1753
        %v1755 = vpop.f32.mrb[0].mxu0
        %1756 = vmatprep.mubr.f32.mxu0 0.0
        %1757 = vmatmul.mubr.f32.gmra.mrb[0].mxu0 %v357
        %v1758 = vpop.f32.mrb[0].mxu0
        %v1759 = vadd.f32 0.0, %v1758
        %v1760 = vpop.f32.mrb[0].mxu0
        %1761 = vmatprep.mubr.f32.mxu0 0.0
        %1762 = vmatmul.mubr.f32.gmra.mrb[0].mxu0 %v1107
        %v1763 = vpop.f32.mrb[0].mxu0
        %v1764 = vadd.f32 0.0, %v1763
        %v1765 = vpop.f32.mrb[0].mxu0
        %1766 = vmatprep.mubr.f32.mxu0 0.0
        %1767 = vmatmul.mubr.f32.gmra.mrb[0].mxu0 %v1109
        %v1768 = vpop.f32.mrb[0].mxu0
        %v1769 = vadd.f32 0.0, %v1768
        %v1770 = vpop.f32.mrb[0].mxu0
        %1771 = vmatprep.mubr.f32.mxu0 0.0
        %1772 = vmatmul.mubr.f32.gmra.mrb[0].mxu0 %v1630
        %v1773 = vpop.f32.mrb[0].mxu0
        %v1774 = vadd.f32 0.0, %v1773
        %v1775 = vpop.f32.mrb[0].mxu0
        %1776 = vmatprep.mubr.f32.mxu0 0.0
        %1777 = vmatmul.mubr.f32.gmra.mrb[0].mxu0 %v1632
        %v1778 = vpop.f32.mrb[0].mxu0
        %v1779 = vadd.f32 0.0, %v1778
        %v1780 = vpop.f32.mrb[0].mxu0
        %1781 = vdwg.mxu0
        %v1782 = vadd.f32 %v1606, %v1704
        %v1783 = vadd.f32 %v1607, %v1709
        %v1784 = vadd.f32 %v1608, %v1714
        %v1785 = vadd.f32 %v1609, %v1719
        %v1786 = vadd.f32 %v1610, %v1724
        %v1787 = vadd.f32 %v1611, %v1729
        %v1788 = vadd.f32 %v1612, %v1734
        %v1789 = vadd.f32 %v1613, %v1739
        %v1790 = vadd.f32 %v1614, %v1744
        %v1791 = vadd.f32 %v1615, %v1749
        %v1792 = vadd.f32 %v1616, %v1754
        %v1793 = vadd.f32 %v1617, %v1759
        %v1794 = vadd.f32 %v1618, %v1764
        %v1795 = vadd.f32 %v1619, %v1769
        %v1796 = vadd.f32 %v1620, %v1774
        %v1797 = vadd.f32 %v1621, %v1779
        %v1798 = vrot.slane %v255, 2
        %v1799 = vrot.slane %v256, 2
        %v1800 = vsel %vm688, %v1798, %v1799
        %v1801 = vrot.slane %v257, 2
        %v1802 = vsel %vm688, %v1799, %v1801
        %s1803 = scalar_lea.vmem %s1, 32
        %v1804 = vld [vmem:[%s1803] sm:$0xf]
        %v1805 = vsel %vm326, %v1800, 0
        %v1807 = vsel %vm326, %v1802, 0
        %v1810 = vsel %vm359, %v1804, 0
        %1812 = vmatprep.subr.mxu0 0.0
        %1813 = vmatpush1.msra.mxu0 %v1810
        %1814 = vmatprep.subr.mxu0 0.0
        %1815 = vmatpush1.msra.mxu0 0.0
        %1816 = vmatprep.subr.mxu0 0.0
        %1817 = vmatpush1.msra.mxu0 0.0
        %1818 = vmatprep.subr.mxu0 0.0
        %1819 = vmatpush1.msra.mxu0 0.0
        %1820 = vmatprep.subr.mxu0 0.0
        %1821 = vmatpush1.msra.mxu0 0.0
        %1822 = vmatprep.subr.mxu0 0.0
        %1823 = vmatpush1.msra.mxu0 0.0
        %1824 = vmatprep.subr.mxu0 0.0
        %1825 = vmatpush1.msra.mxu0 0.0
        %1826 = vmatprep.subr.mxu0 0.0
        %1827 = vmatpush1.msra.mxu0 0.0
        %1828 = vmatprep.subr.mxu0 0.0
        %1829 = vmatpush1.msra.mxu0 0.0
        %1830 = vmatprep.subr.mxu0 0.0
        %1831 = vmatpush1.msra.mxu0 0.0
        %1832 = vmatprep.subr.mxu0 0.0
        %1833 = vmatpush1.msra.mxu0 0.0
        %1834 = vmatprep.subr.mxu0 0.0
        %1835 = vmatpush1.msra.mxu0 0.0
        %1836 = vmatprep.subr.mxu0 0.0
        %1837 = vmatpush1.msra.mxu0 0.0
        %1838 = vmatprep.subr.mxu0 0.0
        %1839 = vmatpush1.msra.mxu0 0.0
        %1840 = vmatprep.subr.mxu0 0.0
        %1841 = vmatpush1.msra.mxu0 0.0
        %1842 = vmatprep.subr.mxu0 0.0
        %1843 = vmatpush1.msra.mxu0 0.0
        %1844 = vmatprep.subr.mxu0 0.0
        %1845 = vmatpush1.msra.mxu0 0.0
        %1846 = vmatprep.subr.mxu0 0.0
        %1847 = vmatpush1.msra.mxu0 0.0
        %1848 = vmatprep.subr.mxu0 0.0
        %1849 = vmatpush1.msra.mxu0 0.0
        %1850 = vmatprep.subr.mxu0 0.0
        %1851 = vmatpush1.msra.mxu0 0.0
        %1852 = vmatprep.subr.mxu0 0.0
        %1853 = vmatpush1.msra.mxu0 0.0
        %1854 = vmatprep.subr.mxu0 0.0
        %1855 = vmatpush1.msra.mxu0 0.0
        %1856 = vmatprep.subr.mxu0 0.0
        %1857 = vmatpush1.msra.mxu0 0.0
        %1858 = vmatprep.subr.mxu0 0.0
        %1859 = vmatpush1.msra.mxu0 0.0
        %1860 = vmatprep.subr.mxu0 0.0
        %1861 = vmatpush1.msra.mxu0 0.0
        %1862 = vmatprep.subr.mxu0 0.0
        %1863 = vmatpush1.msra.mxu0 0.0
        %1864 = vmatprep.subr.mxu0 0.0
        %1865 = vmatpush1.msra.mxu0 0.0
        %1866 = vmatprep.subr.mxu0 0.0
        %1867 = vmatpush1.msra.mxu0 0.0
        %1868 = vmatprep.subr.mxu0 0.0
        %1869 = vmatpush1.msra.mxu0 0.0
        %1870 = vmatprep.subr.mxu0 0.0
        %1871 = vmatpush1.msra.mxu0 0.0
        %1872 = vmatprep.subr.mxu0 0.0
        %1873 = vmatpush1.msra.mxu0 0.0
        %1874 = vmatprep.subr.mxu0 0.0
        %1875 = vmatpush1.msra.mxu0 0.0
        %1876 = vmatprep.mubr.f32.mxu0 0.0
        %1877 = vmatmul.mubr.f32.gmra.mrb[0].mxu0 %v739
        %v1878 = vpop.f32.mrb[0].mxu0
        %v1879 = vadd.f32 0.0, %v1878
        %v1880 = vpop.f32.mrb[0].mxu0
        %1881 = vmatprep.mubr.f32.mxu0 0.0
        %1882 = vmatmul.mubr.f32.gmra.mrb[0].mxu0 %v741
        %v1883 = vpop.f32.mrb[0].mxu0
        %v1884 = vadd.f32 0.0, %v1883
        %v1885 = vpop.f32.mrb[0].mxu0
        %1886 = vmatprep.mubr.f32.mxu0 0.0
        %1887 = vmatmul.mubr.f32.gmra.mrb[0].mxu0 %v743
        %v1888 = vpop.f32.mrb[0].mxu0
        %v1889 = vadd.f32 0.0, %v1888
        %v1890 = vpop.f32.mrb[0].mxu0
        %1891 = vmatprep.mubr.f32.mxu0 0.0
        %1892 = vmatmul.mubr.f32.gmra.mrb[0].mxu0 %v745
        %v1893 = vpop.f32.mrb[0].mxu0
        %v1894 = vadd.f32 0.0, %v1893
        %v1895 = vpop.f32.mrb[0].mxu0
        %1896 = vmatprep.mubr.f32.mxu0 0.0
        %1897 = vmatmul.mubr.f32.gmra.mrb[0].mxu0 %v747
        %v1898 = vpop.f32.mrb[0].mxu0
        %v1899 = vadd.f32 0.0, %v1898
        %v1900 = vpop.f32.mrb[0].mxu0
        %1901 = vmatprep.mubr.f32.mxu0 0.0
        %1902 = vmatmul.mubr.f32.gmra.mrb[0].mxu0 %v749
        %v1903 = vpop.f32.mrb[0].mxu0
        %v1904 = vadd.f32 0.0, %v1903
        %v1905 = vpop.f32.mrb[0].mxu0
        %1906 = vmatprep.mubr.f32.mxu0 0.0
        %1907 = vmatmul.mubr.f32.gmra.mrb[0].mxu0 %v751
        %v1908 = vpop.f32.mrb[0].mxu0
        %v1909 = vadd.f32 0.0, %v1908
        %v1910 = vpop.f32.mrb[0].mxu0
        %1911 = vmatprep.mubr.f32.mxu0 0.0
        %1912 = vmatmul.mubr.f32.gmra.mrb[0].mxu0 %v753
        %v1913 = vpop.f32.mrb[0].mxu0
        %v1914 = vadd.f32 0.0, %v1913
        %v1915 = vpop.f32.mrb[0].mxu0
        %1916 = vmatprep.mubr.f32.mxu0 0.0
        %1917 = vmatmul.mubr.f32.gmra.mrb[0].mxu0 %v755
        %v1918 = vpop.f32.mrb[0].mxu0
        %v1919 = vadd.f32 0.0, %v1918
        %v1920 = vpop.f32.mrb[0].mxu0
        %1921 = vmatprep.mubr.f32.mxu0 0.0
        %1922 = vmatmul.mubr.f32.gmra.mrb[0].mxu0 %v757
        %v1923 = vpop.f32.mrb[0].mxu0
        %v1924 = vadd.f32 0.0, %v1923
        %v1925 = vpop.f32.mrb[0].mxu0
        %1926 = vmatprep.mubr.f32.mxu0 0.0
        %1927 = vmatmul.mubr.f32.gmra.mrb[0].mxu0 %v759
        %v1928 = vpop.f32.mrb[0].mxu0
        %v1929 = vadd.f32 0.0, %v1928
        %v1930 = vpop.f32.mrb[0].mxu0
        %1931 = vmatprep.mubr.f32.mxu0 0.0
        %1932 = vmatmul.mubr.f32.gmra.mrb[0].mxu0 %v761
        %v1933 = vpop.f32.mrb[0].mxu0
        %v1934 = vadd.f32 0.0, %v1933
        %v1935 = vpop.f32.mrb[0].mxu0
        %1936 = vmatprep.mubr.f32.mxu0 0.0
        %1937 = vmatmul.mubr.f32.gmra.mrb[0].mxu0 %v1282
        %v1938 = vpop.f32.mrb[0].mxu0
        %v1939 = vadd.f32 0.0, %v1938
        %v1940 = vpop.f32.mrb[0].mxu0
        %1941 = vmatprep.mubr.f32.mxu0 0.0
        %1942 = vmatmul.mubr.f32.gmra.mrb[0].mxu0 %v1284
        %v1943 = vpop.f32.mrb[0].mxu0
        %v1944 = vadd.f32 0.0, %v1943
        %v1945 = vpop.f32.mrb[0].mxu0
        %1946 = vmatprep.mubr.f32.mxu0 0.0
        %1947 = vmatmul.mubr.f32.gmra.mrb[0].mxu0 %v1805
        %v1948 = vpop.f32.mrb[0].mxu0
        %v1949 = vadd.f32 0.0, %v1948
        %v1950 = vpop.f32.mrb[0].mxu0
        %1951 = vmatprep.mubr.f32.mxu0 0.0
        %1952 = vmatmul.mubr.f32.gmra.mrb[0].mxu0 %v1807
        %v1953 = vpop.f32.mrb[0].mxu0
        %v1954 = vadd.f32 0.0, %v1953
        %v1955 = vpop.f32.mrb[0].mxu0
        %1956 = vdwg.mxu0
        %v1957 = vadd.f32 %v1782, %v1879
        %v1958 = vadd.f32 %v1783, %v1884
        %v1959 = vadd.f32 %v1784, %v1889
        %v1960 = vadd.f32 %v1785, %v1894
        %v1961 = vadd.f32 %v1786, %v1899
        %v1962 = vadd.f32 %v1787, %v1904
        %v1963 = vadd.f32 %v1788, %v1909
        %v1964 = vadd.f32 %v1789, %v1914
        %v1965 = vadd.f32 %v1790, %v1919
        %v1966 = vadd.f32 %v1791, %v1924
        %v1967 = vadd.f32 %v1792, %v1929
        %v1968 = vadd.f32 %v1793, %v1934
        %v1969 = vadd.f32 %v1794, %v1939
        %v1970 = vadd.f32 %v1795, %v1944
        %v1971 = vadd.f32 %v1796, %v1949
        %v1972 = vadd.f32 %v1797, %v1954
        %v1973 = vld [vmem:[%s2] sm:$0x1]
        %v1975 = vlaneseq
        %v1976 = vshrl.u32 %v1975, 7
        %v1977 = vsub.s32 0, %v1976
        %v1978 = vrot.slane %v1973, %v1977
        %v1980 = vmul.f32 %v1957, %v1978
        %v1981 = vmul.f32 %v1958, %v1978
        %v1982 = vmul.f32 %v1959, %v1978
        %v1983 = vmul.f32 %v1960, %v1978
        %v1984 = vmul.f32 %v1961, %v1978
        %v1985 = vmul.f32 %v1962, %v1978
        %v1986 = vmul.f32 %v1963, %v1978
        %v1987 = vmul.f32 %v1964, %v1978
        %v1988 = vmul.f32 %v1965, %v1978
        %v1989 = vmul.f32 %v1966, %v1978
        %v1990 = vmul.f32 %v1967, %v1978
        %v1991 = vmul.f32 %v1968, %v1978
        %v1992 = vmul.f32 %v1969, %v1978
        %v1993 = vmul.f32 %v1970, %v1978
        %v1994 = vmul.f32 %v1971, %v1978
        %v1995 = vmul.f32 %v1972, %v1978
        %v1996 = vld [vmem:[%s3] sm:$0x1]
        %v1998 = vlaneseq
        %v1999 = vshrl.u32 %v1998, 7
        %v2000 = vsub.s32 0, %v1999
        %v2001 = vrot.slane %v1996, %v2000
        %v2003 = vadd.f32 %v1980, %v2001
        %v2004 = vadd.f32 %v1981, %v2001
        %v2005 = vadd.f32 %v1982, %v2001
        %v2006 = vadd.f32 %v1983, %v2001
        %v2007 = vadd.f32 %v1984, %v2001
        %v2008 = vadd.f32 %v1985, %v2001
        %v2009 = vadd.f32 %v1986, %v2001
        %v2010 = vadd.f32 %v1987, %v2001
        %v2011 = vadd.f32 %v1988, %v2001
        %v2012 = vadd.f32 %v1989, %v2001
        %v2013 = vadd.f32 %v1990, %v2001
        %v2014 = vadd.f32 %v1991, %v2001
        %v2015 = vadd.f32 %v1992, %v2001
        %v2016 = vadd.f32 %v1993, %v2001
        %v2017 = vadd.f32 %v1994, %v2001
        %v2018 = vadd.f32 %v1995, %v2001
        %v2019 = vmax.f32 %v2003, 0.0
        %v2020 = vmax.f32 %v2004, 0.0
        %v2021 = vmax.f32 %v2005, 0.0
        %v2022 = vmax.f32 %v2006, 0.0
        %v2023 = vmax.f32 %v2007, 0.0
        %v2024 = vmax.f32 %v2008, 0.0
        %v2025 = vmax.f32 %v2009, 0.0
        %v2026 = vmax.f32 %v2010, 0.0
        %v2027 = vmax.f32 %v2011, 0.0
        %v2028 = vmax.f32 %v2012, 0.0
        %v2029 = vmax.f32 %v2013, 0.0
        %v2030 = vmax.f32 %v2014, 0.0
        %v2031 = vmax.f32 %v2015, 0.0
        %v2032 = vmax.f32 %v2016, 0.0
        %v2033 = vmax.f32 %v2017, 0.0
        %v2034 = vmax.f32 %v2018, 0.0
        %vm2035 = vcmask 130048
        %2036 = vst.msk [vmem:[%s216] sm:$0xff] %vm2035, %v2019
        %2037 = vst.msk [vmem:[%s216 + $0x8] sm:$0xff] %vm2035, %v2020
        %2038 = vst.msk [vmem:[%s216 + $0x10] sm:$0xff] %vm2035, %v2021
        %2039 = vst.msk [vmem:[%s216 + $0x18] sm:$0xff] %vm2035, %v2022
        %2040 = vst.msk [vmem:[%s216 + $0x20] sm:$0xff] %vm2035, %v2023
        %2041 = vst.msk [vmem:[%s216 + $0x28] sm:$0xff] %vm2035, %v2024
        %2042 = vst.msk [vmem:[%s216 + $0x30] sm:$0xff] %vm2035, %v2025
        %2043 = vst.msk [vmem:[%s216 + $0x38] sm:$0xff] %vm2035, %v2026
        %2044 = vst.msk [vmem:[%s216 + $0x40] sm:$0xff] %vm2035, %v2027
        %2045 = vst.msk [vmem:[%s216 + $0x48] sm:$0xff] %vm2035, %v2028
        %2046 = vst.msk [vmem:[%s216 + $0x50] sm:$0xff] %vm2035, %v2029
        %2047 = vst.msk [vmem:[%s216 + $0x58] sm:$0xff] %vm2035, %v2030
        %2048 = vst.msk [vmem:[%s216 + $0x60] sm:$0xff] %vm2035, %v2031
        %2049 = vst.msk [vmem:[%s216 + $0x68] sm:$0xff] %vm2035, %v2032
        %2050 = vst.msk [vmem:[%s216 + $0x70] sm:$0xff] %vm2035, %v2033
        %2051 = vst.msk [vmem:[%s216 + $0x78] sm:$0xff] %vm2035, %v2034
        %s2052 = sand.u32 %s135, 1
        %s2053 = scalar_lea.sflag [#allocation3], %s2052
        %s2054 = sand.u32 %s135, 1
        %s2055 = smul.addr %s2054, 128
        %s2056 = scalar_lea.vmem [#allocation2], %s2055
        // Predicated region
        $region37: #{tpu_custom_call.1} parent=35 // pred_check
          %p2057 = pneg %p145
        $region38: #{tpu_custom_call.1} parent=35 // pred_check_branch
          %2059 = sbr.rel (%p2057) target = $region40
        $region39: #{tpu_custom_call.1} parent=35 // pred_region
          %s2060 = smul.u32 %s22, 2
          %s2061 = sadd.s32 %s2060, %s23
          %s2063 = ssub.s32 2048, 2048
          %2064 = vsyncadd %s2053, %s2063
          %s2065 = smul.addr %s2061, 16
          %s2066 = smul.addr %s2065, 128
          %s2067 = scalar_lea.hbm %s4, %s2066
          %s2068 = sshll.u32 %s2056, 4
          %s2069 = int_to_ptr.vmem [resolvable:$true] %s2068
          %2074 = dma.vmem_to_hbm [thread:$0]  %s2069, 2048, %s2067, %s2053, 128, 128, 8
        $region40: #{tpu_custom_call.1} parent=35 // pred_fallthru
          _
      $region36: #{tpu_custom_call.1} parent=5 // pred_fallthru
        _
      %p2075 = scmp.le.s32.totalorder 2, %s13
      // Predicated region
      $region41: #{tpu_custom_call.1} parent=5 // pred_check
        %p2076 = pneg %p2075
      $region42: #{tpu_custom_call.1} parent=5 // pred_check_branch
        %2078 = sbr.rel (%p2076) target = $region44
      $region43: #{tpu_custom_call.1} parent=5 // pred_region
        %s2079 = ssub.s32 %s13, 2
        // Predicated region
        $region45: #{tpu_custom_call.1} parent=43 // pred_check
          %p2080 = pneg %p151
        $region46: #{tpu_custom_call.1} parent=43 // pred_check_branch
          %2082 = sbr.rel (%p2080) target = $region48
        $region47: #{tpu_custom_call.1} parent=43 // pred_region
          %s2083 = sand.u32 %s136, 1
          %s2084 = scalar_lea.sflag [#allocation3], %s2083
          %s2085 = sand.u32 %s136, 1
          %s2086 = smul.addr %s2085, 128
          %s2087 = scalar_lea.vmem [#allocation2], %s2086
          %2088 = dma.done %s2084, 2048
        $region48: #{tpu_custom_call.1} parent=43 // pred_fallthru
          _
      $region44: #{tpu_custom_call.1} parent=5 // pred_fallthru
        _
    $region6: #{tpu_custom_call.1} parent=1 // loop_footer
      %s17 = sadd.s32 1, %s13
    $region7: #{tpu_custom_call.1} parent=1 // loop_footer_branch
      %12 = sbr.rel target = $region3
    $region8: #{tpu_custom_call.1} parent=1 // loop_exit
      _
    %2089 = vsyncpa [#allocation3], 1
    %s2090 = scalar_lea.sflag [#allocation3], 1
    %2091 = vsyncpa %s2090, 1

</llo_original>
